<compile_context>
chip_gen: v7x
topology: tpu7x:2x2x1
jax: 0.10.0
libtpu: 0.0.40
codegen_flags: <defaults>
</compile_context>

<pallas_src>
import functools
import math

import jax
import jax.numpy as jnp
from jax.experimental import pallas as pl
from jax.experimental.pallas import tpu as pltpu


def _round_up(x, m):
    return (x + m - 1) // m * m


# ---------------------------------------------------------------------------
# Fused kernel: x -> [Linear (+act)]*(n-1) -> Linear -> log_softmax
# ---------------------------------------------------------------------------
def fused_mlp_kernel(*refs, n_layers, act, out_real, douts_pad):
    """refs = (x, W_0..W_{n-1}, bias_slab, out). Whole layer chain stays in VMEM."""
    x_ref = refs[0]
    w_refs = refs[1:1 + n_layers]
    b_ref = refs[1 + n_layers]
    o_ref = refs[2 + n_layers]

    h = x_ref[...]                                        # bf16 (TB, Din_pad)
    for i in range(n_layers):
        dout_pad = douts_pad[i]
        y = jnp.dot(h, w_refs[i][...], preferred_element_type=jnp.float32)
        y = y + b_ref[i:i + 1, 0:dout_pad]                # (1, dout_pad) broadcast over rows
        if i < n_layers - 1:
            if act == "S":
                y = jax.nn.sigmoid(y)
            elif act == "R":
                y = jnp.maximum(y, 0.0)
            elif act == "T":
                y = jnp.tanh(y)
            # unknown activation code -> identity (matches the PyTorch if/elif chain)
            h = y.astype(jnp.bfloat16)                    # VMEM-resident hidden activation
        else:
            if dout_pad > out_real:                       # mask padded output lanes
                lane = jax.lax.broadcasted_iota(jnp.int32, y.shape, 1)
                y = jnp.where(lane < out_real, y, -jnp.inf)
            m = jnp.max(y, axis=1, keepdims=True)
            s = y - m
            lse = jnp.log(jnp.sum(jnp.exp(s), axis=1, keepdims=True))
            o_ref[...] = s - lse


# ---------------------------------------------------------------------------
# Module equivalent
# ---------------------------------------------------------------------------
class MyModelPallas:
    IN_FEATURES = 3 * 40 * 40   # 4800, fixed by the PyTorch forward's .view
    OUT_FEATURES = 10

    def __init__(self, layer, a_function, neuron, key):
        self.a_function = a_function
        if layer == 1:
            widths = [self.IN_FEATURES, self.OUT_FEATURES]
        else:
            widths = [self.IN_FEATURES] + [neuron] * (layer - 1) + [self.OUT_FEATURES]
        self.widths = widths
        self.widths_pad = [_round_up(w, 128) for w in widths]
        self.n_layers = len(widths) - 1
        self.max_wpad = max(self.widths_pad[1:])

        # deterministic init mimicking nn.Linear's uniform(-1/sqrt(fan_in), 1/sqrt(fan_in)),
        # stored zero-padded to lane-dense shapes; weights kept in bf16 in HBM.
        weights = []
        bias_rows = []
        for i in range(self.n_layers):
            din, dout = widths[i], widths[i + 1]
            din_p, dout_p = self.widths_pad[i], self.widths_pad[i + 1]
            key, kw, kb = jax.random.split(key, 3)
            bound = 1.0 / math.sqrt(din)
            w = jax.random.uniform(kw, (din, dout), jnp.float32, -bound, bound)
            b = jax.random.uniform(kb, (dout,), jnp.float32, -bound, bound)
            w_p = jnp.zeros((din_p, dout_p), jnp.float32).at[:din, :dout].set(w)
            weights.append(w_p.astype(jnp.bfloat16))
            bias_rows.append(jnp.zeros((self.max_wpad,), jnp.float32).at[:dout].set(b))
        self.weights = weights
        self.bias_slab = jnp.stack(bias_rows, axis=0)     # (n_layers, max_wpad) f32

    def __call__(self, x):
        B = x.shape[0]
        din, din_p = self.widths[0], self.widths_pad[0]
        out_p = self.widths_pad[-1]
        n = self.n_layers

        # Batch tiling: single block for small batches, 256-row tiles with a 'parallel'
        # grid axis for large batches (lets v7x use both TensorCores).
        if B <= 256:
            tb = _round_up(max(B, 8), 8)
            b_pad = tb
        else:
            tb = 256
            b_pad = _round_up(B, tb)
        grid_b = b_pad // tb

        # Glue (plain JAX): flatten NCHW -> (B, 4800), zero-pad, cast to bf16.
        h = x.reshape(B, -1).astype(jnp.float32)
        h = jnp.pad(h, ((0, b_pad - B), (0, din_p - din)))
        h = h.astype(jnp.bfloat16)

        in_specs = [pl.BlockSpec((tb, din_p), lambda i: (i, 0))]
        for k in range(n):
            in_specs.append(
                pl.BlockSpec((self.widths_pad[k], self.widths_pad[k + 1]),
                             lambda i: (0, 0)))
        in_specs.append(pl.BlockSpec((n, self.max_wpad), lambda i: (0, 0)))
        out_spec = pl.BlockSpec((tb, out_p), lambda i: (i, 0))

        # VMEM budget: bf16 weights + I/O tiles with double-buffer headroom.
        bytes_w = sum(int(w.size) * 2 for w in self.weights)
        bytes_io = tb * din_p * 2 + tb * out_p * 4 + int(self.bias_slab.size) * 4
        needed = 2 * bytes_w + 2 * bytes_io + (4 << 20)
        vmem_limit = int(min(max(needed, 32 << 20), 64 << 20))
        # TODO(synk): add a K-tiled grid path (f32 accumulator + pl.when init/finalize) if the
        # fused weights ever exceed the ~64 MiB v7x VMEM budget (very large `neuron`).

        kernel = functools.partial(
            fused_mlp_kernel,
            n_layers=n,
            act=self.a_function,
            out_real=self.OUT_FEATURES,
            douts_pad=tuple(self.widths_pad[1:]),
        )
        out_full = pl.pallas_call(
            kernel,
            grid=(grid_b,),
            in_specs=in_specs,
            out_specs=out_spec,
            out_shape=jax.ShapeDtypeStruct((b_pad, out_p), jnp.float32),
            compiler_params=pltpu.CompilerParams(
                dimension_semantics=("parallel",),
                vmem_limit_bytes=vmem_limit,
            ),
        )(h, *self.weights, self.bias_slab)
        return out_full[:B, :self.OUT_FEATURES]

    # pure-JAX reference (same bf16-rounded operands) for correctness checking
    def reference(self, x):
        B = x.shape[0]
        h = x.reshape(B, -1).astype(jnp.bfloat16).astype(jnp.float32)
        n = self.n_layers
        for i in range(n):
            din, dout = self.widths[i], self.widths[i + 1]
            w = self.weights[i][:din, :dout].astype(jnp.float32)
            b = self.bias_slab[i, :dout]
            h = h @ w + b
            if i < n - 1:
                if self.a_function == "S":
                    h = jax.nn.sigmoid(h)
                elif self.a_function == "R":
                    h = jnp.maximum(h, 0.0)
                elif self.a_function == "T":
                    h = jnp.tanh(h)
                h = h.astype(jnp.bfloat16).astype(jnp.float32)
        return jax.nn.log_softmax(h, axis=1)


if __name__ == "__main__":
    key = jax.random.PRNGKey(0)
    key, kx, kp = jax.random.split(key, 3)

    # small config: 3 layers, ReLU ('R'), 32 hidden neurons, batch 2
    model = MyModelPallas(layer=3, a_function="R", neuron=32, key=kp)
    x = jax.random.normal(kx, (2, 3, 40, 40), dtype=jnp.float32)

    out = model(x)
    out = jax.block_until_ready(out)

    ref = model.reference(x)
    assert out.shape == (2, 10), out.shape
    assert jnp.allclose(out, ref, atol=2e-3, rtol=2e-3), "mismatch vs reference"

    print("KERNEL_OK")
</pallas_src>

<mosaic_0001>
module attributes {stable_mosaic.version = 11 : i64} {
  func.func @fused_mlp_kernel(%arg0: i32, %arg1: memref<8x4864xbf16, #tpu.memory_space<vmem>>, %arg2: memref<4864x128xbf16, #tpu.memory_space<vmem>>, %arg3: memref<128x128xbf16, #tpu.memory_space<vmem>>, %arg4: memref<128x128xbf16, #tpu.memory_space<vmem>>, %arg5: memref<3x128xf32, #tpu.memory_space<vmem>>, %arg6: memref<8x128xf32, #tpu.memory_space<vmem>>) attributes {dimension_semantics = [#tpu.dimension_semantics<parallel>], iteration_bounds = array<i64: 1>, scalar_prefetch = 0 : i64, scratch_operands = 0 : i64, tpu.core_type = #tpu.core_type<tc>, window_params = [{transform_indices = @transform_0, window_bounds = array<i64: 8, 4864>}, {pipeline_mode = #tpu.pipeline_mode<synchronous>, transform_indices = @transform_1, window_bounds = array<i64: 4864, 128>}, {pipeline_mode = #tpu.pipeline_mode<synchronous>, transform_indices = @transform_2, window_bounds = array<i64: 128, 128>}, {pipeline_mode = #tpu.pipeline_mode<synchronous>, transform_indices = @transform_3, window_bounds = array<i64: 128, 128>}, {pipeline_mode = #tpu.pipeline_mode<synchronous>, transform_indices = @transform_4, window_bounds = array<i64: 3, 128>}, {transform_indices = @transform_5, window_bounds = array<i64: 8, 128>}]} {
    %c0 = arith.constant 0 : index
    %c0_0 = arith.constant 0 : index
    %0 = vector.load %arg1[%c0, %c0_0] : memref<8x4864xbf16, #tpu.memory_space<vmem>>, vector<8x4864xbf16>
    %c0_1 = arith.constant 0 : index
    %c0_2 = arith.constant 0 : index
    %1 = vector.load %arg2[%c0_1, %c0_2] : memref<4864x128xbf16, #tpu.memory_space<vmem>>, vector<4864x128xbf16>
    %cst = arith.constant dense<0.000000e+00> : vector<8x128xf32>
    %2 = tpu.matmul %0, %1, %cst {dimension_numbers = #tpu.dot_dimension_numbers<[1], [0], [0], [1], [0, 0, 1, 1], [], []>} : vector<8x4864xbf16>, vector<4864x128xbf16>, vector<8x128xf32> -> vector<8x128xf32>
    %c0_3 = arith.constant 0 : index
    %c0_4 = arith.constant 0 : index
    %3 = vector.load %arg5[%c0_3, %c0_4] : memref<3x128xf32, #tpu.memory_space<vmem>>, vector<1x128xf32>
    %4 = vector.broadcast %3 : vector<1x128xf32> to vector<8x128xf32>
    %5 = arith.addf %2, %4 : vector<8x128xf32>
    %cst_5 = arith.constant 0.000000e+00 : f32
    %6 = vector.broadcast %cst_5 : f32 to vector<8x128xf32>
    %7 = arith.maximumf %5, %6 : vector<8x128xf32>
    %8 = arith.truncf %7 : vector<8x128xf32> to vector<8x128xbf16>
    %c0_6 = arith.constant 0 : index
    %c0_7 = arith.constant 0 : index
    %9 = vector.load %arg3[%c0_6, %c0_7] : memref<128x128xbf16, #tpu.memory_space<vmem>>, vector<128x128xbf16>
    %cst_8 = arith.constant dense<0.000000e+00> : vector<8x128xf32>
    %10 = tpu.matmul %8, %9, %cst_8 {dimension_numbers = #tpu.dot_dimension_numbers<[1], [0], [0], [1], [0, 0, 1, 1], [], []>} : vector<8x128xbf16>, vector<128x128xbf16>, vector<8x128xf32> -> vector<8x128xf32>
    %c1 = arith.constant 1 : index
    %c0_9 = arith.constant 0 : index
    %11 = vector.load %arg5[%c1, %c0_9] : memref<3x128xf32, #tpu.memory_space<vmem>>, vector<1x128xf32>
    %12 = vector.broadcast %11 : vector<1x128xf32> to vector<8x128xf32>
    %13 = arith.addf %10, %12 : vector<8x128xf32>
    %cst_10 = arith.constant 0.000000e+00 : f32
    %14 = vector.broadcast %cst_10 : f32 to vector<8x128xf32>
    %15 = arith.maximumf %13, %14 : vector<8x128xf32>
    %16 = arith.truncf %15 : vector<8x128xf32> to vector<8x128xbf16>
    %c0_11 = arith.constant 0 : index
    %c0_12 = arith.constant 0 : index
    %17 = vector.load %arg4[%c0_11, %c0_12] : memref<128x128xbf16, #tpu.memory_space<vmem>>, vector<128x128xbf16>
    %cst_13 = arith.constant dense<0.000000e+00> : vector<8x128xf32>
    %18 = tpu.matmul %16, %17, %cst_13 {dimension_numbers = #tpu.dot_dimension_numbers<[1], [0], [0], [1], [0, 0, 1, 1], [], []>} : vector<8x128xbf16>, vector<128x128xbf16>, vector<8x128xf32> -> vector<8x128xf32>
    %c2 = arith.constant 2 : index
    %c0_14 = arith.constant 0 : index
    %19 = vector.load %arg5[%c2, %c0_14] : memref<3x128xf32, #tpu.memory_space<vmem>>, vector<1x128xf32>
    %20 = vector.broadcast %19 : vector<1x128xf32> to vector<8x128xf32>
    %21 = arith.addf %18, %20 : vector<8x128xf32>
    %22 = tpu.iota {dimensions = array<i32: 1>} : vector<8x128xi32>
    %c10_i32 = arith.constant 10 : i32
    %23 = vector.broadcast %c10_i32 : i32 to vector<8x128xi32>
    %24 = arith.cmpi slt, %22, %23 : vector<8x128xi32>
    %cst_15 = arith.constant 0xFF800000 : f32
    %25 = vector.broadcast %cst_15 : f32 to vector<8x128xf32>
    %26 = arith.select %24, %21, %25 : vector<8x128xi1>, vector<8x128xf32>
    %cst_16 = arith.constant dense<0xFF800000> : vector<8xf32>
    %27 = vector.multi_reduction <maximumf>, %26, %cst_16 [1] : vector<8x128xf32> to vector<8xf32>
    %28 = vector.shape_cast %27 : vector<8xf32> to vector<8x1xf32>
    %29 = vector.broadcast %28 : vector<8x1xf32> to vector<8x128xf32>
    %30 = arith.subf %26, %29 : vector<8x128xf32>
    %31 = math.exp %30 : vector<8x128xf32>
    %cst_17 = arith.constant dense<0.000000e+00> : vector<8xf32>
    %32 = vector.multi_reduction <add>, %31, %cst_17 [1] : vector<8x128xf32> to vector<8xf32>
    %33 = vector.shape_cast %32 : vector<8xf32> to vector<8x1xf32>
    %34 = math.log %33 : vector<8x1xf32>
    %35 = vector.broadcast %34 : vector<8x1xf32> to vector<8x128xf32>
    %36 = arith.subf %30, %35 : vector<8x128xf32>
    %c0_18 = arith.constant 0 : index
    %c0_19 = arith.constant 0 : index
    %37 = vector.load %arg6[%c0_18, %c0_19] : memref<8x128xf32, #tpu.memory_space<vmem>>, vector<8x128xf32>
    tpu.vector_store %arg6[%c0_18, %c0_19], %36 {strides = array<i32>} : memref<8x128xf32, #tpu.memory_space<vmem>>, vector<8x128xf32>,
    return
  }
  func.func @transform_0(%arg0: i32) -> (i32, i32) {
    %c0_i32 = arith.constant 0 : i32
    %c0_i32_0 = arith.constant 0 : i32
    return %arg0, %c0_i32 : i32, i32
  }
  func.func @transform_1(%arg0: i32) -> (i32, i32) {
    %c0_i32 = arith.constant 0 : i32
    %c0_i32_0 = arith.constant 0 : i32
    %c0_i32_1 = arith.constant 0 : i32
    return %c0_i32, %c0_i32_0 : i32, i32
  }
  func.func @transform_2(%arg0: i32) -> (i32, i32) {
    %c0_i32 = arith.constant 0 : i32
    %c0_i32_0 = arith.constant 0 : i32
    %c0_i32_1 = arith.constant 0 : i32
    return %c0_i32, %c0_i32_0 : i32, i32
  }
  func.func @transform_3(%arg0: i32) -> (i32, i32) {
    %c0_i32 = arith.constant 0 : i32
    %c0_i32_0 = arith.constant 0 : i32
    %c0_i32_1 = arith.constant 0 : i32
    return %c0_i32, %c0_i32_0 : i32, i32
  }
  func.func @transform_4(%arg0: i32) -> (i32, i32) {
    %c0_i32 = arith.constant 0 : i32
    %c0_i32_0 = arith.constant 0 : i32
    %c0_i32_1 = arith.constant 0 : i32
    return %c0_i32, %c0_i32_0 : i32, i32
  }
  func.func @transform_5(%arg0: i32) -> (i32, i32) {
    %c0_i32 = arith.constant 0 : i32
    %c0_i32_0 = arith.constant 0 : i32
    return %arg0, %c0_i32 : i32, i32
  }
}

</mosaic_0001>

<llo_original>
// kernel: tpu_custom_call.1
$region0: #{tpu_custom_call.1}
  #allocation0 [shape = 'u32[]', space=smem, size = 0x4, offset = 0x4, fixed_abs, tag = 'smem constant byte address 0x4 - core index']
  #allocation1 [shape = 'u32[144,128]{1,0:T(1,128)}', space=vmem, size = 0x12000, scoped, tag = 'internal scratch']
  %s0 = inlined_call_operand.hbm [shape: bf16[8,4864], index: 0, kind: input, shape index: {}]
  %s1 = inlined_call_operand.hbm [shape: bf16[4864,128], index: 1, kind: input, shape index: {}]
  %s2 = inlined_call_operand.hbm [shape: bf16[128,128], index: 2, kind: input, shape index: {}]
  %s3 = inlined_call_operand.hbm [shape: bf16[128,128], index: 3, kind: input, shape index: {}]
  %s4 = inlined_call_operand.hbm [shape: f32[3,128], index: 4, kind: input, shape index: {}]
  %s5 = inlined_call_operand.hbm [shape: f32[8,128], index: 5, kind: output, shape index: {}]
  %s6 = sld [smem:[#allocation0]]
  $region50: #{tpu_custom_call.1} parent=0
    _
  %s8 = ssub.s32 1, %s6
  %s9 = scalar_select 0, %s8, %s6
  $region1: #{tpu_custom_call.1} parent=0
    #allocation2 [shape = 'u8[77824]{0}', space=vmem, size = 0x13000, scoped, tag = 'input window, operand 0, single buffered']
    #allocation3 [shape = 's32[1]{0}', space=sflag, size = 0x4, scoped, tag = 'scoped memory for tpu_custom_call.1']
    #allocation4 [shape = 's32[1]{0}', space=sflag, size = 0x4, scoped, tag = 'scoped memory for tpu_custom_call.1']
    #allocation5 [shape = 'u8[1245184]{0}', space=vmem, size = 0x130000, scoped, tag = 'input window, operand 1, single buffered']
    #allocation6 [shape = 's32[1]{0}', space=sflag, size = 0x4, scoped, tag = 'scoped memory for tpu_custom_call.1']
    #allocation7 [shape = 'u8[32768]{0}', space=vmem, size = 0x8000, scoped, tag = 'input window, operand 2, single buffered']
    #allocation8 [shape = 'u8[32768]{0}', space=vmem, size = 0x8000, scoped, tag = 'input window, operand 3, single buffered']
    #allocation9 [shape = 's32[1]{0}', space=sflag, size = 0x4, scoped, tag = 'scoped memory for tpu_custom_call.1']
    #allocation10 [shape = 'u8[2048]{0}', space=vmem, size = 0x800, scoped, tag = 'input window, operand 4, single buffered']
    #allocation11 [shape = 'u8[4096]{0}', space=vmem, size = 0x1000, scoped, tag = 'output window, operand 0, single buffered']
    %10 = vsyncpa [#allocation3], 0
    %11 = vsyncpa [#allocation6], 0
    %12 = vsyncpa [#allocation9], 0
    %13 = vsyncpa [#allocation4], 0
    // Predicated region
    $region2: #{tpu_custom_call.1} parent=1 // pred_check
      _
    $region3: #{tpu_custom_call.1} parent=1 // pred_check_branch
      %15 = sbr.rel (0) target = $region5
    $region4: #{tpu_custom_call.1} parent=1 // pred_region
      %s17 = ssub.s32 2432, 2432
      %18 = vsyncadd [#allocation3], %s17
      %s20 = sshll.u32 [#allocation2], 4
      %s21 = int_to_ptr.vmem [resolvable:$true] %s20
      %23 = dma.hbm_to_vmem [thread:$0]  %s0, 2432, %s21, [#allocation3]
    $region5: #{tpu_custom_call.1} parent=1 // pred_fallthru
      _
    // Predicated region
    $region6: #{tpu_custom_call.1} parent=1 // pred_check
      _
    $region7: #{tpu_custom_call.1} parent=1 // pred_check_branch
      %25 = sbr.rel (0) target = $region9
    $region8: #{tpu_custom_call.1} parent=1 // pred_region
      %s27 = ssub.s32 38912, 38912
      %28 = vsyncadd [#allocation6], %s27
      %s29 = sshll.u32 [#allocation5], 4
      %s30 = int_to_ptr.vmem [resolvable:$true] %s29
      %35 = dma.hbm_to_vmem [thread:$0]  %s1, 38912, %s30, [#allocation6], 64, 64, 4
    $region9: #{tpu_custom_call.1} parent=1 // pred_fallthru
      _
    // Predicated region
    $region10: #{tpu_custom_call.1} parent=1 // pred_check
      _
    $region11: #{tpu_custom_call.1} parent=1 // pred_check_branch
      %37 = sbr.rel (0) target = $region13
    $region12: #{tpu_custom_call.1} parent=1 // pred_region
      %s39 = ssub.s32 1024, 1024
      %40 = vsyncadd [#allocation6], %s39
      %s41 = sshll.u32 [#allocation7], 4
      %s42 = int_to_ptr.vmem [resolvable:$true] %s41
      %47 = dma.hbm_to_vmem [thread:$0]  %s2, 1024, %s42, [#allocation6], 64, 64, 4
    $region13: #{tpu_custom_call.1} parent=1 // pred_fallthru
      _
    // Predicated region
    $region14: #{tpu_custom_call.1} parent=1 // pred_check
      _
    $region15: #{tpu_custom_call.1} parent=1 // pred_check_branch
      %49 = sbr.rel (0) target = $region17
    $region16: #{tpu_custom_call.1} parent=1 // pred_region
      %s51 = ssub.s32 1024, 1024
      %52 = vsyncadd [#allocation9], %s51
      %s53 = sshll.u32 [#allocation8], 4
      %s54 = int_to_ptr.vmem [resolvable:$true] %s53
      %59 = dma.hbm_to_vmem [thread:$0]  %s3, 1024, %s54, [#allocation9], 64, 64, 4
    $region17: #{tpu_custom_call.1} parent=1 // pred_fallthru
      _
    // Predicated region
    $region18: #{tpu_custom_call.1} parent=1 // pred_check
      _
    $region19: #{tpu_custom_call.1} parent=1 // pred_check_branch
      %61 = sbr.rel (0) target = $region21
    $region20: #{tpu_custom_call.1} parent=1 // pred_region
      %s63 = ssub.s32 64, 64
      %64 = vsyncadd [#allocation9], %s63
      %s66 = sshll.u32 [#allocation10], 4
      %s67 = int_to_ptr.vmem [resolvable:$true] %s66
      %69 = dma.hbm_to_vmem [thread:$0]  %s4, 64, %s67, [#allocation9]
    $region21: #{tpu_custom_call.1} parent=1 // pred_fallthru
      _
    // Predicated region
    $region22: #{tpu_custom_call.1} parent=1 // pred_check
      _
    $region23: #{tpu_custom_call.1} parent=1 // pred_check_branch
      %71 = sbr.rel (0) target = $region25
    $region24: #{tpu_custom_call.1} parent=1 // pred_region
      %72 = dma.done [#allocation3], 2432
    $region25: #{tpu_custom_call.1} parent=1 // pred_fallthru
      _
    // Predicated region
    $region26: #{tpu_custom_call.1} parent=1 // pred_check
      _
    $region27: #{tpu_custom_call.1} parent=1 // pred_check_branch
      %74 = sbr.rel (0) target = $region29
    $region28: #{tpu_custom_call.1} parent=1 // pred_region
      %75 = dma.done [#allocation6], 38912
    $region29: #{tpu_custom_call.1} parent=1 // pred_fallthru
      _
    // Predicated region
    $region30: #{tpu_custom_call.1} parent=1 // pred_check
      _
    $region31: #{tpu_custom_call.1} parent=1 // pred_check_branch
      %77 = sbr.rel (0) target = $region33
    $region32: #{tpu_custom_call.1} parent=1 // pred_region
      %78 = dma.done [#allocation6], 1024
    $region33: #{tpu_custom_call.1} parent=1 // pred_fallthru
      _
    // Predicated region
    $region34: #{tpu_custom_call.1} parent=1 // pred_check
      _
    $region35: #{tpu_custom_call.1} parent=1 // pred_check_branch
      %80 = sbr.rel (0) target = $region37
    $region36: #{tpu_custom_call.1} parent=1 // pred_region
      %81 = dma.done [#allocation9], 1024
    $region37: #{tpu_custom_call.1} parent=1 // pred_fallthru
      _
    // Predicated region
    $region38: #{tpu_custom_call.1} parent=1 // pred_check
      _
    $region39: #{tpu_custom_call.1} parent=1 // pred_check_branch
      %83 = sbr.rel (0) target = $region41
    $region40: #{tpu_custom_call.1} parent=1 // pred_region
      %84 = dma.done [#allocation9], 64
    $region41: #{tpu_custom_call.1} parent=1 // pred_fallthru
      _
    %v86 = vld [vmem:[#allocation2] sm:$0xff]
    %v87 = vld [vmem:[#allocation2 + $0x8] sm:$0xff]
    %v88 = vld [vmem:[#allocation2 + $0x10] sm:$0xff]
    %v89 = vld [vmem:[#allocation2 + $0x18] sm:$0xff]
    %v90 = vld [vmem:[#allocation2 + $0x20] sm:$0xff]
    %v91 = vld [vmem:[#allocation2 + $0x28] sm:$0xff]
    %v92 = vld [vmem:[#allocation2 + $0x30] sm:$0xff]
    %v93 = vld [vmem:[#allocation2 + $0x38] sm:$0xff]
    %v94 = vld [vmem:[#allocation2 + $0x40] sm:$0xff]
    %v95 = vld [vmem:[#allocation2 + $0x48] sm:$0xff]
    %v96 = vld [vmem:[#allocation2 + $0x50] sm:$0xff]
    %v97 = vld [vmem:[#allocation2 + $0x58] sm:$0xff]
    %v98 = vld [vmem:[#allocation2 + $0x60] sm:$0xff]
    %v99 = vld [vmem:[#allocation2 + $0x68] sm:$0xff]
    %v100 = vld [vmem:[#allocation2 + $0x70] sm:$0xff]
    %v101 = vld [vmem:[#allocation2 + $0x78] sm:$0xff]
    %v102 = vld [vmem:[#allocation2 + $0x80] sm:$0xff]
    %v103 = vld [vmem:[#allocation2 + $0x88] sm:$0xff]
    %v104 = vld [vmem:[#allocation2 + $0x90] sm:$0xff]
    %v105 = vld [vmem:[#allocation5] sm:$0xf]
    %v106 = vld [vmem:[#allocation5 + $0x4] sm:$0xf]
    %v107 = vld [vmem:[#allocation5 + $0x8] sm:$0xf]
    %v108 = vld [vmem:[#allocation5 + $0xc] sm:$0xf]
    %v109 = vld [vmem:[#allocation5 + $0x10] sm:$0xf]
    %v110 = vld [vmem:[#allocation5 + $0x14] sm:$0xf]
    %v111 = vld [vmem:[#allocation5 + $0x18] sm:$0xf]
    %v112 = vld [vmem:[#allocation5 + $0x1c] sm:$0xf]
    %v113 = vld [vmem:[#allocation5 + $0x20] sm:$0xf]
    %v114 = vld [vmem:[#allocation5 + $0x24] sm:$0xf]
    %v115 = vld [vmem:[#allocation5 + $0x28] sm:$0xf]
    %v116 = vld [vmem:[#allocation5 + $0x2c] sm:$0xf]
    %v117 = vld [vmem:[#allocation5 + $0x30] sm:$0xf]
    %v118 = vld [vmem:[#allocation5 + $0x34] sm:$0xf]
    %v119 = vld [vmem:[#allocation5 + $0x38] sm:$0xf]
    %v120 = vld [vmem:[#allocation5 + $0x3c] sm:$0xf]
    %v121 = vld [vmem:[#allocation5 + $0x40] sm:$0xf]
    %v122 = vld [vmem:[#allocation5 + $0x44] sm:$0xf]
    %v123 = vld [vmem:[#allocation5 + $0x48] sm:$0xf]
    %v124 = vld [vmem:[#allocation5 + $0x4c] sm:$0xf]
    %v125 = vld [vmem:[#allocation5 + $0x50] sm:$0xf]
    %v126 = vld [vmem:[#allocation5 + $0x54] sm:$0xf]
    %v127 = vld [vmem:[#allocation5 + $0x58] sm:$0xf]
    %v128 = vld [vmem:[#allocation5 + $0x5c] sm:$0xf]
    %v129 = vld [vmem:[#allocation5 + $0x60] sm:$0xf]
    %v130 = vld [vmem:[#allocation5 + $0x64] sm:$0xf]
    %v131 = vld [vmem:[#allocation5 + $0x68] sm:$0xf]
    %v132 = vld [vmem:[#allocation5 + $0x6c] sm:$0xf]
    %v133 = vld [vmem:[#allocation5 + $0x70] sm:$0xf]
    %v134 = vld [vmem:[#allocation5 + $0x74] sm:$0xf]
    %v135 = vld [vmem:[#allocation5 + $0x78] sm:$0xf]
    %v136 = vld [vmem:[#allocation5 + $0x7c] sm:$0xf]
    %v137 = vld [vmem:[#allocation5 + $0x80] sm:$0xf]
    %v138 = vld [vmem:[#allocation5 + $0x84] sm:$0xf]
    %v139 = vld [vmem:[#allocation5 + $0x88] sm:$0xf]
    %v140 = vld [vmem:[#allocation5 + $0x8c] sm:$0xf]
    %v141 = vld [vmem:[#allocation5 + $0x90] sm:$0xf]
    %v142 = vld [vmem:[#allocation5 + $0x94] sm:$0xf]
    %v143 = vld [vmem:[#allocation5 + $0x98] sm:$0xf]
    %v144 = vld [vmem:[#allocation5 + $0x9c] sm:$0xf]
    %v145 = vld [vmem:[#allocation5 + $0xa0] sm:$0xf]
    %v146 = vld [vmem:[#allocation5 + $0xa4] sm:$0xf]
    %v147 = vld [vmem:[#allocation5 + $0xa8] sm:$0xf]
    %v148 = vld [vmem:[#allocation5 + $0xac] sm:$0xf]
    %v149 = vld [vmem:[#allocation5 + $0xb0] sm:$0xf]
    %v150 = vld [vmem:[#allocation5 + $0xb4] sm:$0xf]
    %v151 = vld [vmem:[#allocation5 + $0xb8] sm:$0xf]
    %v152 = vld [vmem:[#allocation5 + $0xbc] sm:$0xf]
    %v153 = vld [vmem:[#allocation5 + $0xc0] sm:$0xf]
    %v154 = vld [vmem:[#allocation5 + $0xc4] sm:$0xf]
    %v155 = vld [vmem:[#allocation5 + $0xc8] sm:$0xf]
    %v156 = vld [vmem:[#allocation5 + $0xcc] sm:$0xf]
    %v157 = vld [vmem:[#allocation5 + $0xd0] sm:$0xf]
    %v158 = vld [vmem:[#allocation5 + $0xd4] sm:$0xf]
    %v159 = vld [vmem:[#allocation5 + $0xd8] sm:$0xf]
    %v160 = vld [vmem:[#allocation5 + $0xdc] sm:$0xf]
    %v161 = vld [vmem:[#allocation5 + $0xe0] sm:$0xf]
    %v162 = vld [vmem:[#allocation5 + $0xe4] sm:$0xf]
    %v163 = vld [vmem:[#allocation5 + $0xe8] sm:$0xf]
    %v164 = vld [vmem:[#allocation5 + $0xec] sm:$0xf]
    %v165 = vld [vmem:[#allocation5 + $0xf0] sm:$0xf]
    %v166 = vld [vmem:[#allocation5 + $0xf4] sm:$0xf]
    %v167 = vld [vmem:[#allocation5 + $0xf8] sm:$0xf]
    %v168 = vld [vmem:[#allocation5 + $0xfc] sm:$0xf]
    %v169 = vld [vmem:[#allocation5 + $0x100] sm:$0xf]
    %v170 = vld [vmem:[#allocation5 + $0x104] sm:$0xf]
    %v171 = vld [vmem:[#allocation5 + $0x108] sm:$0xf]
    %v172 = vld [vmem:[#allocation5 + $0x10c] sm:$0xf]
    %v173 = vld [vmem:[#allocation5 + $0x110] sm:$0xf]
    %v174 = vld [vmem:[#allocation5 + $0x114] sm:$0xf]
    %v175 = vld [vmem:[#allocation5 + $0x118] sm:$0xf]
    %v176 = vld [vmem:[#allocation5 + $0x11c] sm:$0xf]
    %v177 = vld [vmem:[#allocation5 + $0x120] sm:$0xf]
    %v178 = vld [vmem:[#allocation5 + $0x124] sm:$0xf]
    %v179 = vld [vmem:[#allocation5 + $0x128] sm:$0xf]
    %v180 = vld [vmem:[#allocation5 + $0x12c] sm:$0xf]
    %v181 = vld [vmem:[#allocation5 + $0x130] sm:$0xf]
    %v182 = vld [vmem:[#allocation5 + $0x134] sm:$0xf]
    %v183 = vld [vmem:[#allocation5 + $0x138] sm:$0xf]
    %v184 = vld [vmem:[#allocation5 + $0x13c] sm:$0xf]
    %v185 = vld [vmem:[#allocation5 + $0x140] sm:$0xf]
    %v186 = vld [vmem:[#allocation5 + $0x144] sm:$0xf]
    %v187 = vld [vmem:[#allocation5 + $0x148] sm:$0xf]
    %v188 = vld [vmem:[#allocation5 + $0x14c] sm:$0xf]
    %v189 = vld [vmem:[#allocation5 + $0x150] sm:$0xf]
    %v190 = vld [vmem:[#allocation5 + $0x154] sm:$0xf]
    %v191 = vld [vmem:[#allocation5 + $0x158] sm:$0xf]
    %v192 = vld [vmem:[#allocation5 + $0x15c] sm:$0xf]
    %v193 = vld [vmem:[#allocation5 + $0x160] sm:$0xf]
    %v194 = vld [vmem:[#allocation5 + $0x164] sm:$0xf]
    %v195 = vld [vmem:[#allocation5 + $0x168] sm:$0xf]
    %v196 = vld [vmem:[#allocation5 + $0x16c] sm:$0xf]
    %v197 = vld [vmem:[#allocation5 + $0x170] sm:$0xf]
    %v198 = vld [vmem:[#allocation5 + $0x174] sm:$0xf]
    %v199 = vld [vmem:[#allocation5 + $0x178] sm:$0xf]
    %v200 = vld [vmem:[#allocation5 + $0x17c] sm:$0xf]
    %v201 = vld [vmem:[#allocation5 + $0x180] sm:$0xf]
    %v202 = vld [vmem:[#allocation5 + $0x184] sm:$0xf]
    %v203 = vld [vmem:[#allocation5 + $0x188] sm:$0xf]
    %v204 = vld [vmem:[#allocation5 + $0x18c] sm:$0xf]
    %v205 = vld [vmem:[#allocation5 + $0x190] sm:$0xf]
    %v206 = vld [vmem:[#allocation5 + $0x194] sm:$0xf]
    %v207 = vld [vmem:[#allocation5 + $0x198] sm:$0xf]
    %v208 = vld [vmem:[#allocation5 + $0x19c] sm:$0xf]
    %v209 = vld [vmem:[#allocation5 + $0x1a0] sm:$0xf]
    %v210 = vld [vmem:[#allocation5 + $0x1a4] sm:$0xf]
    %v211 = vld [vmem:[#allocation5 + $0x1a8] sm:$0xf]
    %v212 = vld [vmem:[#allocation5 + $0x1ac] sm:$0xf]
    %v213 = vld [vmem:[#allocation5 + $0x1b0] sm:$0xf]
    %v214 = vld [vmem:[#allocation5 + $0x1b4] sm:$0xf]
    %v215 = vld [vmem:[#allocation5 + $0x1b8] sm:$0xf]
    %v216 = vld [vmem:[#allocation5 + $0x1bc] sm:$0xf]
    %v217 = vld [vmem:[#allocation5 + $0x1c0] sm:$0xf]
    %v218 = vld [vmem:[#allocation5 + $0x1c4] sm:$0xf]
    %v219 = vld [vmem:[#allocation5 + $0x1c8] sm:$0xf]
    %v220 = vld [vmem:[#allocation5 + $0x1cc] sm:$0xf]
    %v221 = vld [vmem:[#allocation5 + $0x1d0] sm:$0xf]
    %v222 = vld [vmem:[#allocation5 + $0x1d4] sm:$0xf]
    %v223 = vld [vmem:[#allocation5 + $0x1d8] sm:$0xf]
    %v224 = vld [vmem:[#allocation5 + $0x1dc] sm:$0xf]
    %v225 = vld [vmem:[#allocation5 + $0x1e0] sm:$0xf]
    %v226 = vld [vmem:[#allocation5 + $0x1e4] sm:$0xf]
    %v227 = vld [vmem:[#allocation5 + $0x1e8] sm:$0xf]
    %v228 = vld [vmem:[#allocation5 + $0x1ec] sm:$0xf]
    %v229 = vld [vmem:[#allocation5 + $0x1f0] sm:$0xf]
    %v230 = vld [vmem:[#allocation5 + $0x1f4] sm:$0xf]
    %v231 = vld [vmem:[#allocation5 + $0x1f8] sm:$0xf]
    %v232 = vld [vmem:[#allocation5 + $0x1fc] sm:$0xf]
    %v233 = vld [vmem:[#allocation5 + $0x200] sm:$0xf]
    %v234 = vld [vmem:[#allocation5 + $0x204] sm:$0xf]
    %v235 = vld [vmem:[#allocation5 + $0x208] sm:$0xf]
    %v236 = vld [vmem:[#allocation5 + $0x20c] sm:$0xf]
    %v237 = vld [vmem:[#allocation5 + $0x210] sm:$0xf]
    %v238 = vld [vmem:[#allocation5 + $0x214] sm:$0xf]
    %v239 = vld [vmem:[#allocation5 + $0x218] sm:$0xf]
    %v240 = vld [vmem:[#allocation5 + $0x21c] sm:$0xf]
    %v241 = vld [vmem:[#allocation5 + $0x220] sm:$0xf]
    %v242 = vld [vmem:[#allocation5 + $0x224] sm:$0xf]
    %v243 = vld [vmem:[#allocation5 + $0x228] sm:$0xf]
    %v244 = vld [vmem:[#allocation5 + $0x22c] sm:$0xf]
    %v245 = vld [vmem:[#allocation5 + $0x230] sm:$0xf]
    %v246 = vld [vmem:[#allocation5 + $0x234] sm:$0xf]
    %v247 = vld [vmem:[#allocation5 + $0x238] sm:$0xf]
    %v248 = vld [vmem:[#allocation5 + $0x23c] sm:$0xf]
    %v249 = vld [vmem:[#allocation5 + $0x240] sm:$0xf]
    %v250 = vld [vmem:[#allocation5 + $0x244] sm:$0xf]
    %v251 = vld [vmem:[#allocation5 + $0x248] sm:$0xf]
    %v252 = vld [vmem:[#allocation5 + $0x24c] sm:$0xf]
    %v253 = vld [vmem:[#allocation5 + $0x250] sm:$0xf]
    %v254 = vld [vmem:[#allocation5 + $0x254] sm:$0xf]
    %v255 = vld [vmem:[#allocation5 + $0x258] sm:$0xf]
    %v256 = vld [vmem:[#allocation5 + $0x25c] sm:$0xf]
    %v257 = vld [vmem:[#allocation5 + $0x260] sm:$0xf]
    %v258 = vld [vmem:[#allocation5 + $0x264] sm:$0xf]
    %v259 = vld [vmem:[#allocation5 + $0x268] sm:$0xf]
    %v260 = vld [vmem:[#allocation5 + $0x26c] sm:$0xf]
    %v261 = vld [vmem:[#allocation5 + $0x270] sm:$0xf]
    %v262 = vld [vmem:[#allocation5 + $0x274] sm:$0xf]
    %v263 = vld [vmem:[#allocation5 + $0x278] sm:$0xf]
    %v264 = vld [vmem:[#allocation5 + $0x27c] sm:$0xf]
    %v265 = vld [vmem:[#allocation5 + $0x280] sm:$0xf]
    %v266 = vld [vmem:[#allocation5 + $0x284] sm:$0xf]
    %v267 = vld [vmem:[#allocation5 + $0x288] sm:$0xf]
    %v268 = vld [vmem:[#allocation5 + $0x28c] sm:$0xf]
    %v269 = vld [vmem:[#allocation5 + $0x290] sm:$0xf]
    %v270 = vld [vmem:[#allocation5 + $0x294] sm:$0xf]
    %v271 = vld [vmem:[#allocation5 + $0x298] sm:$0xf]
    %v272 = vld [vmem:[#allocation5 + $0x29c] sm:$0xf]
    %v273 = vld [vmem:[#allocation5 + $0x2a0] sm:$0xf]
    %v274 = vld [vmem:[#allocation5 + $0x2a4] sm:$0xf]
    %v275 = vld [vmem:[#allocation5 + $0x2a8] sm:$0xf]
    %v276 = vld [vmem:[#allocation5 + $0x2ac] sm:$0xf]
    %v277 = vld [vmem:[#allocation5 + $0x2b0] sm:$0xf]
    %v278 = vld [vmem:[#allocation5 + $0x2b4] sm:$0xf]
    %v279 = vld [vmem:[#allocation5 + $0x2b8] sm:$0xf]
    %v280 = vld [vmem:[#allocation5 + $0x2bc] sm:$0xf]
    %v281 = vld [vmem:[#allocation5 + $0x2c0] sm:$0xf]
    %v282 = vld [vmem:[#allocation5 + $0x2c4] sm:$0xf]
    %v283 = vld [vmem:[#allocation5 + $0x2c8] sm:$0xf]
    %v284 = vld [vmem:[#allocation5 + $0x2cc] sm:$0xf]
    %v285 = vld [vmem:[#allocation5 + $0x2d0] sm:$0xf]
    %v286 = vld [vmem:[#allocation5 + $0x2d4] sm:$0xf]
    %v287 = vld [vmem:[#allocation5 + $0x2d8] sm:$0xf]
    %v288 = vld [vmem:[#allocation5 + $0x2dc] sm:$0xf]
    %v289 = vld [vmem:[#allocation5 + $0x2e0] sm:$0xf]
    %v290 = vld [vmem:[#allocation5 + $0x2e4] sm:$0xf]
    %v291 = vld [vmem:[#allocation5 + $0x2e8] sm:$0xf]
    %v292 = vld [vmem:[#allocation5 + $0x2ec] sm:$0xf]
    %v293 = vld [vmem:[#allocation5 + $0x2f0] sm:$0xf]
    %v294 = vld [vmem:[#allocation5 + $0x2f4] sm:$0xf]
    %v295 = vld [vmem:[#allocation5 + $0x2f8] sm:$0xf]
    %v296 = vld [vmem:[#allocation5 + $0x2fc] sm:$0xf]
    %v297 = vld [vmem:[#allocation5 + $0x300] sm:$0xf]
    %v298 = vld [vmem:[#allocation5 + $0x304] sm:$0xf]
    %v299 = vld [vmem:[#allocation5 + $0x308] sm:$0xf]
    %v300 = vld [vmem:[#allocation5 + $0x30c] sm:$0xf]
    %v301 = vld [vmem:[#allocation5 + $0x310] sm:$0xf]
    %v302 = vld [vmem:[#allocation5 + $0x314] sm:$0xf]
    %v303 = vld [vmem:[#allocation5 + $0x318] sm:$0xf]
    %v304 = vld [vmem:[#allocation5 + $0x31c] sm:$0xf]
    %v305 = vld [vmem:[#allocation5 + $0x320] sm:$0xf]
    %v306 = vld [vmem:[#allocation5 + $0x324] sm:$0xf]
    %v307 = vld [vmem:[#allocation5 + $0x328] sm:$0xf]
    %v308 = vld [vmem:[#allocation5 + $0x32c] sm:$0xf]
    %v309 = vld [vmem:[#allocation5 + $0x330] sm:$0xf]
    %v310 = vld [vmem:[#allocation5 + $0x334] sm:$0xf]
    %v311 = vld [vmem:[#allocation5 + $0x338] sm:$0xf]
    %v312 = vld [vmem:[#allocation5 + $0x33c] sm:$0xf]
    %v313 = vld [vmem:[#allocation5 + $0x340] sm:$0xf]
    %v314 = vld [vmem:[#allocation5 + $0x344] sm:$0xf]
    %v315 = vld [vmem:[#allocation5 + $0x348] sm:$0xf]
    %v316 = vld [vmem:[#allocation5 + $0x34c] sm:$0xf]
    %v317 = vld [vmem:[#allocation5 + $0x350] sm:$0xf]
    %v318 = vld [vmem:[#allocation5 + $0x354] sm:$0xf]
    %v319 = vld [vmem:[#allocation5 + $0x358] sm:$0xf]
    %v320 = vld [vmem:[#allocation5 + $0x35c] sm:$0xf]
    %v321 = vld [vmem:[#allocation5 + $0x360] sm:$0xf]
    %v322 = vld [vmem:[#allocation5 + $0x364] sm:$0xf]
    %v323 = vld [vmem:[#allocation5 + $0x368] sm:$0xf]
    %v324 = vld [vmem:[#allocation5 + $0x36c] sm:$0xf]
    %v325 = vld [vmem:[#allocation5 + $0x370] sm:$0xf]
    %v326 = vld [vmem:[#allocation5 + $0x374] sm:$0xf]
    %v327 = vld [vmem:[#allocation5 + $0x378] sm:$0xf]
    %v328 = vld [vmem:[#allocation5 + $0x37c] sm:$0xf]
    %v329 = vld [vmem:[#allocation5 + $0x380] sm:$0xf]
    %v330 = vld [vmem:[#allocation5 + $0x384] sm:$0xf]
    %v331 = vld [vmem:[#allocation5 + $0x388] sm:$0xf]
    %v332 = vld [vmem:[#allocation5 + $0x38c] sm:$0xf]
    %v333 = vld [vmem:[#allocation5 + $0x390] sm:$0xf]
    %v334 = vld [vmem:[#allocation5 + $0x394] sm:$0xf]
    %v335 = vld [vmem:[#allocation5 + $0x398] sm:$0xf]
    %v336 = vld [vmem:[#allocation5 + $0x39c] sm:$0xf]
    %v337 = vld [vmem:[#allocation5 + $0x3a0] sm:$0xf]
    %v338 = vld [vmem:[#allocation5 + $0x3a4] sm:$0xf]
    %v339 = vld [vmem:[#allocation5 + $0x3a8] sm:$0xf]
    %v340 = vld [vmem:[#allocation5 + $0x3ac] sm:$0xf]
    %v341 = vld [vmem:[#allocation5 + $0x3b0] sm:$0xf]
    %v342 = vld [vmem:[#allocation5 + $0x3b4] sm:$0xf]
    %v343 = vld [vmem:[#allocation5 + $0x3b8] sm:$0xf]
    %v344 = vld [vmem:[#allocation5 + $0x3bc] sm:$0xf]
    %v345 = vld [vmem:[#allocation5 + $0x3c0] sm:$0xf]
    %v346 = vld [vmem:[#allocation5 + $0x3c4] sm:$0xf]
    %v347 = vld [vmem:[#allocation5 + $0x3c8] sm:$0xf]
    %v348 = vld [vmem:[#allocation5 + $0x3cc] sm:$0xf]
    %v349 = vld [vmem:[#allocation5 + $0x3d0] sm:$0xf]
    %v350 = vld [vmem:[#allocation5 + $0x3d4] sm:$0xf]
    %v351 = vld [vmem:[#allocation5 + $0x3d8] sm:$0xf]
    %v352 = vld [vmem:[#allocation5 + $0x3dc] sm:$0xf]
    %v353 = vld [vmem:[#allocation5 + $0x3e0] sm:$0xf]
    %v354 = vld [vmem:[#allocation5 + $0x3e4] sm:$0xf]
    %v355 = vld [vmem:[#allocation5 + $0x3e8] sm:$0xf]
    %v356 = vld [vmem:[#allocation5 + $0x3ec] sm:$0xf]
    %v357 = vld [vmem:[#allocation5 + $0x3f0] sm:$0xf]
    %v358 = vld [vmem:[#allocation5 + $0x3f4] sm:$0xf]
    %v359 = vld [vmem:[#allocation5 + $0x3f8] sm:$0xf]
    %v360 = vld [vmem:[#allocation5 + $0x3fc] sm:$0xf]
    %v361 = vld [vmem:[#allocation5 + $0x400] sm:$0xf]
    %v362 = vld [vmem:[#allocation5 + $0x404] sm:$0xf]
    %v363 = vld [vmem:[#allocation5 + $0x408] sm:$0xf]
    %v364 = vld [vmem:[#allocation5 + $0x40c] sm:$0xf]
    %v365 = vld [vmem:[#allocation5 + $0x410] sm:$0xf]
    %v366 = vld [vmem:[#allocation5 + $0x414] sm:$0xf]
    %v367 = vld [vmem:[#allocation5 + $0x418] sm:$0xf]
    %v368 = vld [vmem:[#allocation5 + $0x41c] sm:$0xf]
    %v369 = vld [vmem:[#allocation5 + $0x420] sm:$0xf]
    %v370 = vld [vmem:[#allocation5 + $0x424] sm:$0xf]
    %v371 = vld [vmem:[#allocation5 + $0x428] sm:$0xf]
    %v372 = vld [vmem:[#allocation5 + $0x42c] sm:$0xf]
    %v373 = vld [vmem:[#allocation5 + $0x430] sm:$0xf]
    %v374 = vld [vmem:[#allocation5 + $0x434] sm:$0xf]
    %v375 = vld [vmem:[#allocation5 + $0x438] sm:$0xf]
    %v376 = vld [vmem:[#allocation5 + $0x43c] sm:$0xf]
    %v377 = vld [vmem:[#allocation5 + $0x440] sm:$0xf]
    %v378 = vld [vmem:[#allocation5 + $0x444] sm:$0xf]
    %v379 = vld [vmem:[#allocation5 + $0x448] sm:$0xf]
    %v380 = vld [vmem:[#allocation5 + $0x44c] sm:$0xf]
    %v381 = vld [vmem:[#allocation5 + $0x450] sm:$0xf]
    %v382 = vld [vmem:[#allocation5 + $0x454] sm:$0xf]
    %v383 = vld [vmem:[#allocation5 + $0x458] sm:$0xf]
    %v384 = vld [vmem:[#allocation5 + $0x45c] sm:$0xf]
    %v385 = vld [vmem:[#allocation5 + $0x460] sm:$0xf]
    %v386 = vld [vmem:[#allocation5 + $0x464] sm:$0xf]
    %v387 = vld [vmem:[#allocation5 + $0x468] sm:$0xf]
    %v388 = vld [vmem:[#allocation5 + $0x46c] sm:$0xf]
    %v389 = vld [vmem:[#allocation5 + $0x470] sm:$0xf]
    %v390 = vld [vmem:[#allocation5 + $0x474] sm:$0xf]
    %v391 = vld [vmem:[#allocation5 + $0x478] sm:$0xf]
    %v392 = vld [vmem:[#allocation5 + $0x47c] sm:$0xf]
    %v393 = vld [vmem:[#allocation5 + $0x480] sm:$0xf]
    %v394 = vld [vmem:[#allocation5 + $0x484] sm:$0xf]
    %v395 = vld [vmem:[#allocation5 + $0x488] sm:$0xf]
    %v396 = vld [vmem:[#allocation5 + $0x48c] sm:$0xf]
    %v397 = vld [vmem:[#allocation5 + $0x490] sm:$0xf]
    %v398 = vld [vmem:[#allocation5 + $0x494] sm:$0xf]
    %v399 = vld [vmem:[#allocation5 + $0x498] sm:$0xf]
    %v400 = vld [vmem:[#allocation5 + $0x49c] sm:$0xf]
    %v401 = vld [vmem:[#allocation5 + $0x4a0] sm:$0xf]
    %v402 = vld [vmem:[#allocation5 + $0x4a4] sm:$0xf]
    %v403 = vld [vmem:[#allocation5 + $0x4a8] sm:$0xf]
    %v404 = vld [vmem:[#allocation5 + $0x4ac] sm:$0xf]
    %v405 = vld [vmem:[#allocation5 + $0x4b0] sm:$0xf]
    %v406 = vld [vmem:[#allocation5 + $0x4b4] sm:$0xf]
    %v407 = vld [vmem:[#allocation5 + $0x4b8] sm:$0xf]
    %v408 = vld [vmem:[#allocation5 + $0x4bc] sm:$0xf]
    %v409 = vld [vmem:[#allocation5 + $0x4c0] sm:$0xf]
    %v410 = vld [vmem:[#allocation5 + $0x4c4] sm:$0xf]
    %v411 = vld [vmem:[#allocation5 + $0x4c8] sm:$0xf]
    %v412 = vld [vmem:[#allocation5 + $0x4cc] sm:$0xf]
    %v413 = vld [vmem:[#allocation5 + $0x4d0] sm:$0xf]
    %v414 = vld [vmem:[#allocation5 + $0x4d4] sm:$0xf]
    %v415 = vld [vmem:[#allocation5 + $0x4d8] sm:$0xf]
    %v416 = vld [vmem:[#allocation5 + $0x4dc] sm:$0xf]
    %v417 = vld [vmem:[#allocation5 + $0x4e0] sm:$0xf]
    %v418 = vld [vmem:[#allocation5 + $0x4e4] sm:$0xf]
    %v419 = vld [vmem:[#allocation5 + $0x4e8] sm:$0xf]
    %v420 = vld [vmem:[#allocation5 + $0x4ec] sm:$0xf]
    %v421 = vld [vmem:[#allocation5 + $0x4f0] sm:$0xf]
    %v422 = vld [vmem:[#allocation5 + $0x4f4] sm:$0xf]
    %v423 = vld [vmem:[#allocation5 + $0x4f8] sm:$0xf]
    %v424 = vld [vmem:[#allocation5 + $0x4fc] sm:$0xf]
    %v425 = vld [vmem:[#allocation5 + $0x500] sm:$0xf]
    %v426 = vld [vmem:[#allocation5 + $0x504] sm:$0xf]
    %v427 = vld [vmem:[#allocation5 + $0x508] sm:$0xf]
    %v428 = vld [vmem:[#allocation5 + $0x50c] sm:$0xf]
    %v429 = vld [vmem:[#allocation5 + $0x510] sm:$0xf]
    %v430 = vld [vmem:[#allocation5 + $0x514] sm:$0xf]
    %v431 = vld [vmem:[#allocation5 + $0x518] sm:$0xf]
    %v432 = vld [vmem:[#allocation5 + $0x51c] sm:$0xf]
    %v433 = vld [vmem:[#allocation5 + $0x520] sm:$0xf]
    %v434 = vld [vmem:[#allocation5 + $0x524] sm:$0xf]
    %v435 = vld [vmem:[#allocation5 + $0x528] sm:$0xf]
    %v436 = vld [vmem:[#allocation5 + $0x52c] sm:$0xf]
    %v437 = vld [vmem:[#allocation5 + $0x530] sm:$0xf]
    %v438 = vld [vmem:[#allocation5 + $0x534] sm:$0xf]
    %v439 = vld [vmem:[#allocation5 + $0x538] sm:$0xf]
    %v440 = vld [vmem:[#allocation5 + $0x53c] sm:$0xf]
    %v441 = vld [vmem:[#allocation5 + $0x540] sm:$0xf]
    %v442 = vld [vmem:[#allocation5 + $0x544] sm:$0xf]
    %v443 = vld [vmem:[#allocation5 + $0x548] sm:$0xf]
    %v444 = vld [vmem:[#allocation5 + $0x54c] sm:$0xf]
    %v445 = vld [vmem:[#allocation5 + $0x550] sm:$0xf]
    %v446 = vld [vmem:[#allocation5 + $0x554] sm:$0xf]
    %v447 = vld [vmem:[#allocation5 + $0x558] sm:$0xf]
    %v448 = vld [vmem:[#allocation5 + $0x55c] sm:$0xf]
    %v449 = vld [vmem:[#allocation5 + $0x560] sm:$0xf]
    %v450 = vld [vmem:[#allocation5 + $0x564] sm:$0xf]
    %v451 = vld [vmem:[#allocation5 + $0x568] sm:$0xf]
    %v452 = vld [vmem:[#allocation5 + $0x56c] sm:$0xf]
    %v453 = vld [vmem:[#allocation5 + $0x570] sm:$0xf]
    %v454 = vld [vmem:[#allocation5 + $0x574] sm:$0xf]
    %v455 = vld [vmem:[#allocation5 + $0x578] sm:$0xf]
    %v456 = vld [vmem:[#allocation5 + $0x57c] sm:$0xf]
    %v457 = vld [vmem:[#allocation5 + $0x580] sm:$0xf]
    %v458 = vld [vmem:[#allocation5 + $0x584] sm:$0xf]
    %v459 = vld [vmem:[#allocation5 + $0x588] sm:$0xf]
    %v460 = vld [vmem:[#allocation5 + $0x58c] sm:$0xf]
    %v461 = vld [vmem:[#allocation5 + $0x590] sm:$0xf]
    %v462 = vld [vmem:[#allocation5 + $0x594] sm:$0xf]
    %v463 = vld [vmem:[#allocation5 + $0x598] sm:$0xf]
    %v464 = vld [vmem:[#allocation5 + $0x59c] sm:$0xf]
    %v465 = vld [vmem:[#allocation5 + $0x5a0] sm:$0xf]
    %v466 = vld [vmem:[#allocation5 + $0x5a4] sm:$0xf]
    %v467 = vld [vmem:[#allocation5 + $0x5a8] sm:$0xf]
    %v468 = vld [vmem:[#allocation5 + $0x5ac] sm:$0xf]
    %v469 = vld [vmem:[#allocation5 + $0x5b0] sm:$0xf]
    %v470 = vld [vmem:[#allocation5 + $0x5b4] sm:$0xf]
    %v471 = vld [vmem:[#allocation5 + $0x5b8] sm:$0xf]
    %v472 = vld [vmem:[#allocation5 + $0x5bc] sm:$0xf]
    %v473 = vld [vmem:[#allocation5 + $0x5c0] sm:$0xf]
    %v474 = vld [vmem:[#allocation5 + $0x5c4] sm:$0xf]
    %v475 = vld [vmem:[#allocation5 + $0x5c8] sm:$0xf]
    %v476 = vld [vmem:[#allocation5 + $0x5cc] sm:$0xf]
    %v477 = vld [vmem:[#allocation5 + $0x5d0] sm:$0xf]
    %v478 = vld [vmem:[#allocation5 + $0x5d4] sm:$0xf]
    %v479 = vld [vmem:[#allocation5 + $0x5d8] sm:$0xf]
    %v480 = vld [vmem:[#allocation5 + $0x5dc] sm:$0xf]
    %v481 = vld [vmem:[#allocation5 + $0x5e0] sm:$0xf]
    %v482 = vld [vmem:[#allocation5 + $0x5e4] sm:$0xf]
    %v483 = vld [vmem:[#allocation5 + $0x5e8] sm:$0xf]
    %v484 = vld [vmem:[#allocation5 + $0x5ec] sm:$0xf]
    %v485 = vld [vmem:[#allocation5 + $0x5f0] sm:$0xf]
    %v486 = vld [vmem:[#allocation5 + $0x5f4] sm:$0xf]
    %v487 = vld [vmem:[#allocation5 + $0x5f8] sm:$0xf]
    %v488 = vld [vmem:[#allocation5 + $0x5fc] sm:$0xf]
    %v489 = vld [vmem:[#allocation5 + $0x600] sm:$0xf]
    %v490 = vld [vmem:[#allocation5 + $0x604] sm:$0xf]
    %v491 = vld [vmem:[#allocation5 + $0x608] sm:$0xf]
    %v492 = vld [vmem:[#allocation5 + $0x60c] sm:$0xf]
    %v493 = vld [vmem:[#allocation5 + $0x610] sm:$0xf]
    %v494 = vld [vmem:[#allocation5 + $0x614] sm:$0xf]
    %v495 = vld [vmem:[#allocation5 + $0x618] sm:$0xf]
    %v496 = vld [vmem:[#allocation5 + $0x61c] sm:$0xf]
    %v497 = vld [vmem:[#allocation5 + $0x620] sm:$0xf]
    %v498 = vld [vmem:[#allocation5 + $0x624] sm:$0xf]
    %v499 = vld [vmem:[#allocation5 + $0x628] sm:$0xf]
    %v500 = vld [vmem:[#allocation5 + $0x62c] sm:$0xf]
    %v501 = vld [vmem:[#allocation5 + $0x630] sm:$0xf]
    %v502 = vld [vmem:[#allocation5 + $0x634] sm:$0xf]
    %v503 = vld [vmem:[#allocation5 + $0x638] sm:$0xf]
    %v504 = vld [vmem:[#allocation5 + $0x63c] sm:$0xf]
    %v505 = vld [vmem:[#allocation5 + $0x640] sm:$0xf]
    %v506 = vld [vmem:[#allocation5 + $0x644] sm:$0xf]
    %v507 = vld [vmem:[#allocation5 + $0x648] sm:$0xf]
    %v508 = vld [vmem:[#allocation5 + $0x64c] sm:$0xf]
    %v509 = vld [vmem:[#allocation5 + $0x650] sm:$0xf]
    %v510 = vld [vmem:[#allocation5 + $0x654] sm:$0xf]
    %v511 = vld [vmem:[#allocation5 + $0x658] sm:$0xf]
    %v512 = vld [vmem:[#allocation5 + $0x65c] sm:$0xf]
    %v513 = vld [vmem:[#allocation5 + $0x660] sm:$0xf]
    %v514 = vld [vmem:[#allocation5 + $0x664] sm:$0xf]
    %v515 = vld [vmem:[#allocation5 + $0x668] sm:$0xf]
    %v516 = vld [vmem:[#allocation5 + $0x66c] sm:$0xf]
    %v517 = vld [vmem:[#allocation5 + $0x670] sm:$0xf]
    %v518 = vld [vmem:[#allocation5 + $0x674] sm:$0xf]
    %v519 = vld [vmem:[#allocation5 + $0x678] sm:$0xf]
    %v520 = vld [vmem:[#allocation5 + $0x67c] sm:$0xf]
    %v521 = vld [vmem:[#allocation5 + $0x680] sm:$0xf]
    %v522 = vld [vmem:[#allocation5 + $0x684] sm:$0xf]
    %v523 = vld [vmem:[#allocation5 + $0x688] sm:$0xf]
    %v524 = vld [vmem:[#allocation5 + $0x68c] sm:$0xf]
    %v525 = vld [vmem:[#allocation5 + $0x690] sm:$0xf]
    %v526 = vld [vmem:[#allocation5 + $0x694] sm:$0xf]
    %v527 = vld [vmem:[#allocation5 + $0x698] sm:$0xf]
    %v528 = vld [vmem:[#allocation5 + $0x69c] sm:$0xf]
    %v529 = vld [vmem:[#allocation5 + $0x6a0] sm:$0xf]
    %v530 = vld [vmem:[#allocation5 + $0x6a4] sm:$0xf]
    %v531 = vld [vmem:[#allocation5 + $0x6a8] sm:$0xf]
    %v532 = vld [vmem:[#allocation5 + $0x6ac] sm:$0xf]
    %v533 = vld [vmem:[#allocation5 + $0x6b0] sm:$0xf]
    %v534 = vld [vmem:[#allocation5 + $0x6b4] sm:$0xf]
    %v535 = vld [vmem:[#allocation5 + $0x6b8] sm:$0xf]
    %v536 = vld [vmem:[#allocation5 + $0x6bc] sm:$0xf]
    %v537 = vld [vmem:[#allocation5 + $0x6c0] sm:$0xf]
    %v538 = vld [vmem:[#allocation5 + $0x6c4] sm:$0xf]
    %v539 = vld [vmem:[#allocation5 + $0x6c8] sm:$0xf]
    %v540 = vld [vmem:[#allocation5 + $0x6cc] sm:$0xf]
    %v541 = vld [vmem:[#allocation5 + $0x6d0] sm:$0xf]
    %v542 = vld [vmem:[#allocation5 + $0x6d4] sm:$0xf]
    %v543 = vld [vmem:[#allocation5 + $0x6d8] sm:$0xf]
    %v544 = vld [vmem:[#allocation5 + $0x6dc] sm:$0xf]
    %v545 = vld [vmem:[#allocation5 + $0x6e0] sm:$0xf]
    %v546 = vld [vmem:[#allocation5 + $0x6e4] sm:$0xf]
    %v547 = vld [vmem:[#allocation5 + $0x6e8] sm:$0xf]
    %v548 = vld [vmem:[#allocation5 + $0x6ec] sm:$0xf]
    %v549 = vld [vmem:[#allocation5 + $0x6f0] sm:$0xf]
    %v550 = vld [vmem:[#allocation5 + $0x6f4] sm:$0xf]
    %v551 = vld [vmem:[#allocation5 + $0x6f8] sm:$0xf]
    %v552 = vld [vmem:[#allocation5 + $0x6fc] sm:$0xf]
    %v553 = vld [vmem:[#allocation5 + $0x700] sm:$0xf]
    %v554 = vld [vmem:[#allocation5 + $0x704] sm:$0xf]
    %v555 = vld [vmem:[#allocation5 + $0x708] sm:$0xf]
    %v556 = vld [vmem:[#allocation5 + $0x70c] sm:$0xf]
    %v557 = vld [vmem:[#allocation5 + $0x710] sm:$0xf]
    %v558 = vld [vmem:[#allocation5 + $0x714] sm:$0xf]
    %v559 = vld [vmem:[#allocation5 + $0x718] sm:$0xf]
    %v560 = vld [vmem:[#allocation5 + $0x71c] sm:$0xf]
    %v561 = vld [vmem:[#allocation5 + $0x720] sm:$0xf]
    %v562 = vld [vmem:[#allocation5 + $0x724] sm:$0xf]
    %v563 = vld [vmem:[#allocation5 + $0x728] sm:$0xf]
    %v564 = vld [vmem:[#allocation5 + $0x72c] sm:$0xf]
    %v565 = vld [vmem:[#allocation5 + $0x730] sm:$0xf]
    %v566 = vld [vmem:[#allocation5 + $0x734] sm:$0xf]
    %v567 = vld [vmem:[#allocation5 + $0x738] sm:$0xf]
    %v568 = vld [vmem:[#allocation5 + $0x73c] sm:$0xf]
    %v569 = vld [vmem:[#allocation5 + $0x740] sm:$0xf]
    %v570 = vld [vmem:[#allocation5 + $0x744] sm:$0xf]
    %v571 = vld [vmem:[#allocation5 + $0x748] sm:$0xf]
    %v572 = vld [vmem:[#allocation5 + $0x74c] sm:$0xf]
    %v573 = vld [vmem:[#allocation5 + $0x750] sm:$0xf]
    %v574 = vld [vmem:[#allocation5 + $0x754] sm:$0xf]
    %v575 = vld [vmem:[#allocation5 + $0x758] sm:$0xf]
    %v576 = vld [vmem:[#allocation5 + $0x75c] sm:$0xf]
    %v577 = vld [vmem:[#allocation5 + $0x760] sm:$0xf]
    %v578 = vld [vmem:[#allocation5 + $0x764] sm:$0xf]
    %v579 = vld [vmem:[#allocation5 + $0x768] sm:$0xf]
    %v580 = vld [vmem:[#allocation5 + $0x76c] sm:$0xf]
    %v581 = vld [vmem:[#allocation5 + $0x770] sm:$0xf]
    %v582 = vld [vmem:[#allocation5 + $0x774] sm:$0xf]
    %v583 = vld [vmem:[#allocation5 + $0x778] sm:$0xf]
    %v584 = vld [vmem:[#allocation5 + $0x77c] sm:$0xf]
    %v585 = vld [vmem:[#allocation5 + $0x780] sm:$0xf]
    %v586 = vld [vmem:[#allocation5 + $0x784] sm:$0xf]
    %v587 = vld [vmem:[#allocation5 + $0x788] sm:$0xf]
    %v588 = vld [vmem:[#allocation5 + $0x78c] sm:$0xf]
    %v589 = vld [vmem:[#allocation5 + $0x790] sm:$0xf]
    %v590 = vld [vmem:[#allocation5 + $0x794] sm:$0xf]
    %v591 = vld [vmem:[#allocation5 + $0x798] sm:$0xf]
    %v592 = vld [vmem:[#allocation5 + $0x79c] sm:$0xf]
    %v593 = vld [vmem:[#allocation5 + $0x7a0] sm:$0xf]
    %v594 = vld [vmem:[#allocation5 + $0x7a4] sm:$0xf]
    %v595 = vld [vmem:[#allocation5 + $0x7a8] sm:$0xf]
    %v596 = vld [vmem:[#allocation5 + $0x7ac] sm:$0xf]
    %v597 = vld [vmem:[#allocation5 + $0x7b0] sm:$0xf]
    %v598 = vld [vmem:[#allocation5 + $0x7b4] sm:$0xf]
    %v599 = vld [vmem:[#allocation5 + $0x7b8] sm:$0xf]
    %v600 = vld [vmem:[#allocation5 + $0x7bc] sm:$0xf]
    %v601 = vld [vmem:[#allocation5 + $0x7c0] sm:$0xf]
    %v602 = vld [vmem:[#allocation5 + $0x7c4] sm:$0xf]
    %v603 = vld [vmem:[#allocation5 + $0x7c8] sm:$0xf]
    %v604 = vld [vmem:[#allocation5 + $0x7cc] sm:$0xf]
    %v605 = vld [vmem:[#allocation5 + $0x7d0] sm:$0xf]
    %v606 = vld [vmem:[#allocation5 + $0x7d4] sm:$0xf]
    %v607 = vld [vmem:[#allocation5 + $0x7d8] sm:$0xf]
    %v608 = vld [vmem:[#allocation5 + $0x7dc] sm:$0xf]
    %v609 = vld [vmem:[#allocation5 + $0x7e0] sm:$0xf]
    %v610 = vld [vmem:[#allocation5 + $0x7e4] sm:$0xf]
    %v611 = vld [vmem:[#allocation5 + $0x7e8] sm:$0xf]
    %v612 = vld [vmem:[#allocation5 + $0x7ec] sm:$0xf]
    %v613 = vld [vmem:[#allocation5 + $0x7f0] sm:$0xf]
    %v614 = vld [vmem:[#allocation5 + $0x7f4] sm:$0xf]
    %v615 = vld [vmem:[#allocation5 + $0x7f8] sm:$0xf]
    %v616 = vld [vmem:[#allocation5 + $0x7fc] sm:$0xf]
    %v617 = vld [vmem:[#allocation5 + $0x800] sm:$0xf]
    %v618 = vld [vmem:[#allocation5 + $0x804] sm:$0xf]
    %v619 = vld [vmem:[#allocation5 + $0x808] sm:$0xf]
    %v620 = vld [vmem:[#allocation5 + $0x80c] sm:$0xf]
    %v621 = vld [vmem:[#allocation5 + $0x810] sm:$0xf]
    %v622 = vld [vmem:[#allocation5 + $0x814] sm:$0xf]
    %v623 = vld [vmem:[#allocation5 + $0x818] sm:$0xf]
    %v624 = vld [vmem:[#allocation5 + $0x81c] sm:$0xf]
    %v625 = vld [vmem:[#allocation5 + $0x820] sm:$0xf]
    %v626 = vld [vmem:[#allocation5 + $0x824] sm:$0xf]
    %v627 = vld [vmem:[#allocation5 + $0x828] sm:$0xf]
    %v628 = vld [vmem:[#allocation5 + $0x82c] sm:$0xf]
    %v629 = vld [vmem:[#allocation5 + $0x830] sm:$0xf]
    %v630 = vld [vmem:[#allocation5 + $0x834] sm:$0xf]
    %v631 = vld [vmem:[#allocation5 + $0x838] sm:$0xf]
    %v632 = vld [vmem:[#allocation5 + $0x83c] sm:$0xf]
    %v633 = vld [vmem:[#allocation5 + $0x840] sm:$0xf]
    %v634 = vld [vmem:[#allocation5 + $0x844] sm:$0xf]
    %v635 = vld [vmem:[#allocation5 + $0x848] sm:$0xf]
    %v636 = vld [vmem:[#allocation5 + $0x84c] sm:$0xf]
    %v637 = vld [vmem:[#allocation5 + $0x850] sm:$0xf]
    %v638 = vld [vmem:[#allocation5 + $0x854] sm:$0xf]
    %v639 = vld [vmem:[#allocation5 + $0x858] sm:$0xf]
    %v640 = vld [vmem:[#allocation5 + $0x85c] sm:$0xf]
    %v641 = vld [vmem:[#allocation5 + $0x860] sm:$0xf]
    %v642 = vld [vmem:[#allocation5 + $0x864] sm:$0xf]
    %v643 = vld [vmem:[#allocation5 + $0x868] sm:$0xf]
    %v644 = vld [vmem:[#allocation5 + $0x86c] sm:$0xf]
    %v645 = vld [vmem:[#allocation5 + $0x870] sm:$0xf]
    %v646 = vld [vmem:[#allocation5 + $0x874] sm:$0xf]
    %v647 = vld [vmem:[#allocation5 + $0x878] sm:$0xf]
    %v648 = vld [vmem:[#allocation5 + $0x87c] sm:$0xf]
    %v649 = vld [vmem:[#allocation5 + $0x880] sm:$0xf]
    %v650 = vld [vmem:[#allocation5 + $0x884] sm:$0xf]
    %v651 = vld [vmem:[#allocation5 + $0x888] sm:$0xf]
    %v652 = vld [vmem:[#allocation5 + $0x88c] sm:$0xf]
    %v653 = vld [vmem:[#allocation5 + $0x890] sm:$0xf]
    %v654 = vld [vmem:[#allocation5 + $0x894] sm:$0xf]
    %v655 = vld [vmem:[#allocation5 + $0x898] sm:$0xf]
    %v656 = vld [vmem:[#allocation5 + $0x89c] sm:$0xf]
    %v657 = vld [vmem:[#allocation5 + $0x8a0] sm:$0xf]
    %v658 = vld [vmem:[#allocation5 + $0x8a4] sm:$0xf]
    %v659 = vld [vmem:[#allocation5 + $0x8a8] sm:$0xf]
    %v660 = vld [vmem:[#allocation5 + $0x8ac] sm:$0xf]
    %v661 = vld [vmem:[#allocation5 + $0x8b0] sm:$0xf]
    %v662 = vld [vmem:[#allocation5 + $0x8b4] sm:$0xf]
    %v663 = vld [vmem:[#allocation5 + $0x8b8] sm:$0xf]
    %v664 = vld [vmem:[#allocation5 + $0x8bc] sm:$0xf]
    %v665 = vld [vmem:[#allocation5 + $0x8c0] sm:$0xf]
    %v666 = vld [vmem:[#allocation5 + $0x8c4] sm:$0xf]
    %v667 = vld [vmem:[#allocation5 + $0x8c8] sm:$0xf]
    %v668 = vld [vmem:[#allocation5 + $0x8cc] sm:$0xf]
    %v669 = vld [vmem:[#allocation5 + $0x8d0] sm:$0xf]
    %v670 = vld [vmem:[#allocation5 + $0x8d4] sm:$0xf]
    %v671 = vld [vmem:[#allocation5 + $0x8d8] sm:$0xf]
    %v672 = vld [vmem:[#allocation5 + $0x8dc] sm:$0xf]
    %v673 = vld [vmem:[#allocation5 + $0x8e0] sm:$0xf]
    %v674 = vld [vmem:[#allocation5 + $0x8e4] sm:$0xf]
    %v675 = vld [vmem:[#allocation5 + $0x8e8] sm:$0xf]
    %v676 = vld [vmem:[#allocation5 + $0x8ec] sm:$0xf]
    %v677 = vld [vmem:[#allocation5 + $0x8f0] sm:$0xf]
    %v678 = vld [vmem:[#allocation5 + $0x8f4] sm:$0xf]
    %v679 = vld [vmem:[#allocation5 + $0x8f8] sm:$0xf]
    %v680 = vld [vmem:[#allocation5 + $0x8fc] sm:$0xf]
    %v681 = vld [vmem:[#allocation5 + $0x900] sm:$0xf]
    %v682 = vld [vmem:[#allocation5 + $0x904] sm:$0xf]
    %v683 = vld [vmem:[#allocation5 + $0x908] sm:$0xf]
    %v684 = vld [vmem:[#allocation5 + $0x90c] sm:$0xf]
    %v685 = vld [vmem:[#allocation5 + $0x910] sm:$0xf]
    %v686 = vld [vmem:[#allocation5 + $0x914] sm:$0xf]
    %v687 = vld [vmem:[#allocation5 + $0x918] sm:$0xf]
    %v688 = vld [vmem:[#allocation5 + $0x91c] sm:$0xf]
    %v689 = vld [vmem:[#allocation5 + $0x920] sm:$0xf]
    %v690 = vld [vmem:[#allocation5 + $0x924] sm:$0xf]
    %v691 = vld [vmem:[#allocation5 + $0x928] sm:$0xf]
    %v692 = vld [vmem:[#allocation5 + $0x92c] sm:$0xf]
    %v693 = vld [vmem:[#allocation5 + $0x930] sm:$0xf]
    %v694 = vld [vmem:[#allocation5 + $0x934] sm:$0xf]
    %v695 = vld [vmem:[#allocation5 + $0x938] sm:$0xf]
    %v696 = vld [vmem:[#allocation5 + $0x93c] sm:$0xf]
    %v697 = vld [vmem:[#allocation5 + $0x940] sm:$0xf]
    %v698 = vld [vmem:[#allocation5 + $0x944] sm:$0xf]
    %v699 = vld [vmem:[#allocation5 + $0x948] sm:$0xf]
    %v700 = vld [vmem:[#allocation5 + $0x94c] sm:$0xf]
    %v701 = vld [vmem:[#allocation5 + $0x950] sm:$0xf]
    %v702 = vld [vmem:[#allocation5 + $0x954] sm:$0xf]
    %v703 = vld [vmem:[#allocation5 + $0x958] sm:$0xf]
    %v704 = vld [vmem:[#allocation5 + $0x95c] sm:$0xf]
    %v705 = vld [vmem:[#allocation5 + $0x960] sm:$0xf]
    %v706 = vld [vmem:[#allocation5 + $0x964] sm:$0xf]
    %v707 = vld [vmem:[#allocation5 + $0x968] sm:$0xf]
    %v708 = vld [vmem:[#allocation5 + $0x96c] sm:$0xf]
    %v709 = vld [vmem:[#allocation5 + $0x970] sm:$0xf]
    %v710 = vld [vmem:[#allocation5 + $0x974] sm:$0xf]
    %v711 = vld [vmem:[#allocation5 + $0x978] sm:$0xf]
    %v712 = vld [vmem:[#allocation5 + $0x97c] sm:$0xf]
    %v713 = vld [vmem:[#allocation10] sm:$0x1]
    %v714 = vlaneseq
    %v715 = vshrl.u32 %v714, 7
    %v716 = vsub.s32 0, %v715
    %v717 = vrot.slane %v713, %v716
    %v737 = vunpack.c.l.b16 %v86
    %v738 = vunpack.c.h.b16 %v86
    %v739 = vunpack.c.l.b16 %v87
    %v740 = vunpack.c.h.b16 %v87
    %v741 = vunpack.c.l.b16 %v88
    %v742 = vunpack.c.h.b16 %v88
    %v743 = vunpack.c.l.b16 %v89
    %v744 = vunpack.c.h.b16 %v89
    %v745 = vunpack.c.l.b16 %v90
    %v746 = vunpack.c.h.b16 %v90
    %v747 = vunpack.c.l.b16 %v91
    %v748 = vunpack.c.h.b16 %v91
    %v749 = vunpack.c.l.b16 %v92
    %v750 = vunpack.c.h.b16 %v92
    %v751 = vunpack.c.l.b16 %v93
    %v752 = vunpack.c.h.b16 %v93
    %v753 = vunpack.c.l.b16 %v94
    %v754 = vunpack.c.h.b16 %v94
    %v755 = vunpack.c.l.b16 %v95
    %v756 = vunpack.c.h.b16 %v95
    %v757 = vunpack.c.l.b16 %v96
    %v758 = vunpack.c.h.b16 %v96
    %v759 = vunpack.c.l.b16 %v97
    %v760 = vunpack.c.h.b16 %v97
    %v761 = vunpack.c.l.b16 %v98
    %v762 = vunpack.c.h.b16 %v98
    %v763 = vunpack.c.l.b16 %v99
    %v764 = vunpack.c.h.b16 %v99
    %v765 = vunpack.c.l.b16 %v100
    %v766 = vunpack.c.h.b16 %v100
    %v767 = vunpack.c.l.b16 %v101
    %v768 = vunpack.c.h.b16 %v101
    %v769 = vunpack.c.l.b16 %v102
    %v770 = vunpack.c.h.b16 %v102
    %v771 = vunpack.c.l.b16 %v103
    %v772 = vunpack.c.h.b16 %v103
    %v773 = vunpack.c.l.b16 %v104
    %v774 = vunpack.c.h.b16 %v104
    %v775 = vpack.c.b16 %v737, %v737
    %v776 = vpack.c.b16 %v738, %v738
    %v777 = vpack.c.b16 %v739, %v739
    %v778 = vpack.c.b16 %v740, %v740
    %v779 = vpack.c.b16 %v741, %v741
    %v780 = vpack.c.b16 %v742, %v742
    %v781 = vpack.c.b16 %v743, %v743
    %v782 = vpack.c.b16 %v744, %v744
    %v783 = vpack.c.b16 %v745, %v745
    %v784 = vpack.c.b16 %v746, %v746
    %v785 = vpack.c.b16 %v747, %v747
    %v786 = vpack.c.b16 %v748, %v748
    %v787 = vpack.c.b16 %v749, %v749
    %v788 = vpack.c.b16 %v750, %v750
    %v789 = vpack.c.b16 %v751, %v751
    %v790 = vpack.c.b16 %v752, %v752
    %v791 = vpack.c.b16 %v753, %v753
    %v792 = vpack.c.b16 %v754, %v754
    %v793 = vpack.c.b16 %v755, %v755
    %v794 = vpack.c.b16 %v756, %v756
    %v795 = vpack.c.b16 %v757, %v757
    %v796 = vpack.c.b16 %v758, %v758
    %v797 = vpack.c.b16 %v759, %v759
    %v798 = vpack.c.b16 %v760, %v760
    %v799 = vpack.c.b16 %v761, %v761
    %v800 = vpack.c.b16 %v762, %v762
    %v801 = vpack.c.b16 %v763, %v763
    %v802 = vpack.c.b16 %v764, %v764
    %v803 = vpack.c.b16 %v765, %v765
    %v804 = vpack.c.b16 %v766, %v766
    %v805 = vpack.c.b16 %v767, %v767
    %v806 = vpack.c.b16 %v768, %v768
    %v807 = vpack.c.b16 %v769, %v769
    %v808 = vpack.c.b16 %v770, %v770
    %v809 = vpack.c.b16 %v771, %v771
    %v810 = vpack.c.b16 %v772, %v772
    %v811 = vpack.c.b16 %v773, %v773
    %v812 = vpack.c.b16 %v774, %v774
    %v1459 = vunpack.c.l.b16 %v105
    %v1460 = vunpack.c.l.b16 %v106
    %v1461 = vunpack.c.l.b16 %v107
    %v1462 = vunpack.c.l.b16 %v108
    %v1463 = vunpack.c.l.b16 %v109
    %v1464 = vunpack.c.l.b16 %v110
    %v1465 = vunpack.c.l.b16 %v111
    %v1466 = vunpack.c.l.b16 %v112
    %v1467 = vunpack.c.l.b16 %v113
    %v1468 = vunpack.c.l.b16 %v114
    %v1469 = vunpack.c.l.b16 %v115
    %v1470 = vunpack.c.l.b16 %v116
    %v1471 = vunpack.c.l.b16 %v117
    %v1472 = vunpack.c.l.b16 %v118
    %v1473 = vunpack.c.l.b16 %v119
    %v1474 = vunpack.c.l.b16 %v120
    %v1475 = vunpack.c.l.b16 %v121
    %v1476 = vunpack.c.l.b16 %v122
    %v1477 = vunpack.c.l.b16 %v123
    %v1478 = vunpack.c.l.b16 %v124
    %v1479 = vunpack.c.l.b16 %v125
    %v1480 = vunpack.c.l.b16 %v126
    %v1481 = vunpack.c.l.b16 %v127
    %v1482 = vunpack.c.l.b16 %v128
    %v1483 = vunpack.c.l.b16 %v129
    %v1484 = vunpack.c.l.b16 %v130
    %v1485 = vunpack.c.l.b16 %v131
    %v1486 = vunpack.c.l.b16 %v132
    %v1487 = vunpack.c.l.b16 %v133
    %v1488 = vunpack.c.l.b16 %v134
    %v1489 = vunpack.c.l.b16 %v135
    %v1490 = vunpack.c.l.b16 %v136
    %v1491 = vunpack.c.l.b16 %v137
    %v1492 = vunpack.c.l.b16 %v138
    %v1493 = vunpack.c.l.b16 %v139
    %v1494 = vunpack.c.l.b16 %v140
    %v1495 = vunpack.c.l.b16 %v141
    %v1496 = vunpack.c.l.b16 %v142
    %v1497 = vunpack.c.l.b16 %v143
    %v1498 = vunpack.c.l.b16 %v144
    %v1499 = vunpack.c.l.b16 %v145
    %v1500 = vunpack.c.l.b16 %v146
    %v1501 = vunpack.c.l.b16 %v147
    %v1502 = vunpack.c.l.b16 %v148
    %v1503 = vunpack.c.l.b16 %v149
    %v1504 = vunpack.c.l.b16 %v150
    %v1505 = vunpack.c.l.b16 %v151
    %v1506 = vunpack.c.l.b16 %v152
    %v1507 = vunpack.c.l.b16 %v153
    %v1508 = vunpack.c.l.b16 %v154
    %v1509 = vunpack.c.l.b16 %v155
    %v1510 = vunpack.c.l.b16 %v156
    %v1511 = vunpack.c.l.b16 %v157
    %v1512 = vunpack.c.l.b16 %v158
    %v1513 = vunpack.c.l.b16 %v159
    %v1514 = vunpack.c.l.b16 %v160
    %v1515 = vunpack.c.l.b16 %v161
    %v1516 = vunpack.c.l.b16 %v162
    %v1517 = vunpack.c.l.b16 %v163
    %v1518 = vunpack.c.l.b16 %v164
    %v1519 = vunpack.c.l.b16 %v165
    %v1520 = vunpack.c.l.b16 %v166
    %v1521 = vunpack.c.l.b16 %v167
    %v1522 = vunpack.c.l.b16 %v168
    %v1523 = vunpack.c.l.b16 %v169
    %v1524 = vunpack.c.l.b16 %v170
    %v1525 = vunpack.c.l.b16 %v171
    %v1526 = vunpack.c.l.b16 %v172
    %v1527 = vunpack.c.l.b16 %v173
    %v1528 = vunpack.c.l.b16 %v174
    %v1529 = vunpack.c.l.b16 %v175
    %v1530 = vunpack.c.l.b16 %v176
    %v1531 = vunpack.c.l.b16 %v177
    %v1532 = vunpack.c.l.b16 %v178
    %v1533 = vunpack.c.l.b16 %v179
    %v1534 = vunpack.c.l.b16 %v180
    %v1535 = vunpack.c.l.b16 %v181
    %v1536 = vunpack.c.l.b16 %v182
    %v1537 = vunpack.c.l.b16 %v183
    %v1538 = vunpack.c.l.b16 %v184
    %v1539 = vunpack.c.l.b16 %v185
    %v1540 = vunpack.c.l.b16 %v186
    %v1541 = vunpack.c.l.b16 %v187
    %v1542 = vunpack.c.l.b16 %v188
    %v1543 = vunpack.c.l.b16 %v189
    %v1544 = vunpack.c.l.b16 %v190
    %v1545 = vunpack.c.l.b16 %v191
    %v1546 = vunpack.c.l.b16 %v192
    %v1547 = vunpack.c.l.b16 %v193
    %v1548 = vunpack.c.l.b16 %v194
    %v1549 = vunpack.c.l.b16 %v195
    %v1550 = vunpack.c.l.b16 %v196
    %v1551 = vunpack.c.l.b16 %v197
    %v1552 = vunpack.c.l.b16 %v198
    %v1553 = vunpack.c.l.b16 %v199
    %v1554 = vunpack.c.l.b16 %v200
    %v1555 = vunpack.c.l.b16 %v201
    %v1556 = vunpack.c.l.b16 %v202
    %v1557 = vunpack.c.l.b16 %v203
    %v1558 = vunpack.c.l.b16 %v204
    %v1559 = vunpack.c.l.b16 %v205
    %v1560 = vunpack.c.l.b16 %v206
    %v1561 = vunpack.c.l.b16 %v207
    %v1562 = vunpack.c.l.b16 %v208
    %v1563 = vunpack.c.l.b16 %v209
    %v1564 = vunpack.c.l.b16 %v210
    %v1565 = vunpack.c.l.b16 %v211
    %v1566 = vunpack.c.l.b16 %v212
    %v1567 = vunpack.c.l.b16 %v213
    %v1568 = vunpack.c.l.b16 %v214
    %v1569 = vunpack.c.l.b16 %v215
    %v1570 = vunpack.c.l.b16 %v216
    %v1571 = vunpack.c.l.b16 %v217
    %v1572 = vunpack.c.l.b16 %v218
    %v1573 = vunpack.c.l.b16 %v219
    %v1574 = vunpack.c.l.b16 %v220
    %v1575 = vunpack.c.l.b16 %v221
    %v1576 = vunpack.c.l.b16 %v222
    %v1577 = vunpack.c.l.b16 %v223
    %v1578 = vunpack.c.l.b16 %v224
    %v1579 = vunpack.c.l.b16 %v225
    %v1580 = vunpack.c.l.b16 %v226
    %v1581 = vunpack.c.l.b16 %v227
    %v1582 = vunpack.c.l.b16 %v228
    %v1583 = vunpack.c.l.b16 %v229
    %v1584 = vunpack.c.l.b16 %v230
    %v1585 = vunpack.c.l.b16 %v231
    %v1586 = vunpack.c.l.b16 %v232
    %v1587 = vunpack.c.l.b16 %v233
    %v1588 = vunpack.c.l.b16 %v234
    %v1589 = vunpack.c.l.b16 %v235
    %v1590 = vunpack.c.l.b16 %v236
    %v1591 = vunpack.c.l.b16 %v237
    %v1592 = vunpack.c.l.b16 %v238
    %v1593 = vunpack.c.l.b16 %v239
    %v1594 = vunpack.c.l.b16 %v240
    %v1595 = vunpack.c.l.b16 %v241
    %v1596 = vunpack.c.l.b16 %v242
    %v1597 = vunpack.c.l.b16 %v243
    %v1598 = vunpack.c.l.b16 %v244
    %v1599 = vunpack.c.l.b16 %v245
    %v1600 = vunpack.c.l.b16 %v246
    %v1601 = vunpack.c.l.b16 %v247
    %v1602 = vunpack.c.l.b16 %v248
    %v1603 = vunpack.c.l.b16 %v249
    %v1604 = vunpack.c.l.b16 %v250
    %v1605 = vunpack.c.l.b16 %v251
    %v1606 = vunpack.c.l.b16 %v252
    %v1607 = vunpack.c.l.b16 %v253
    %v1608 = vunpack.c.l.b16 %v254
    %v1609 = vunpack.c.l.b16 %v255
    %v1610 = vunpack.c.l.b16 %v256
    %v1611 = vunpack.c.l.b16 %v257
    %v1612 = vunpack.c.l.b16 %v258
    %v1613 = vunpack.c.l.b16 %v259
    %v1614 = vunpack.c.l.b16 %v260
    %v1615 = vunpack.c.l.b16 %v261
    %v1616 = vunpack.c.l.b16 %v262
    %v1617 = vunpack.c.l.b16 %v263
    %v1618 = vunpack.c.l.b16 %v264
    %v1619 = vunpack.c.l.b16 %v265
    %v1620 = vunpack.c.l.b16 %v266
    %v1621 = vunpack.c.l.b16 %v267
    %v1622 = vunpack.c.l.b16 %v268
    %v1623 = vunpack.c.l.b16 %v269
    %v1624 = vunpack.c.l.b16 %v270
    %v1625 = vunpack.c.l.b16 %v271
    %v1626 = vunpack.c.l.b16 %v272
    %v1627 = vunpack.c.l.b16 %v273
    %v1628 = vunpack.c.l.b16 %v274
    %v1629 = vunpack.c.l.b16 %v275
    %v1630 = vunpack.c.l.b16 %v276
    %v1631 = vunpack.c.l.b16 %v277
    %v1632 = vunpack.c.l.b16 %v278
    %v1633 = vunpack.c.l.b16 %v279
    %v1634 = vunpack.c.l.b16 %v280
    %v1635 = vunpack.c.l.b16 %v281
    %v1636 = vunpack.c.l.b16 %v282
    %v1637 = vunpack.c.l.b16 %v283
    %v1638 = vunpack.c.l.b16 %v284
    %v1639 = vunpack.c.l.b16 %v285
    %v1640 = vunpack.c.l.b16 %v286
    %v1641 = vunpack.c.l.b16 %v287
    %v1642 = vunpack.c.l.b16 %v288
    %v1643 = vunpack.c.l.b16 %v289
    %v1644 = vunpack.c.l.b16 %v290
    %v1645 = vunpack.c.l.b16 %v291
    %v1646 = vunpack.c.l.b16 %v292
    %v1647 = vunpack.c.l.b16 %v293
    %v1648 = vunpack.c.l.b16 %v294
    %v1649 = vunpack.c.l.b16 %v295
    %v1650 = vunpack.c.l.b16 %v296
    %v1651 = vunpack.c.l.b16 %v297
    %v1652 = vunpack.c.l.b16 %v298
    %v1653 = vunpack.c.l.b16 %v299
    %v1654 = vunpack.c.l.b16 %v300
    %v1655 = vunpack.c.l.b16 %v301
    %v1656 = vunpack.c.l.b16 %v302
    %v1657 = vunpack.c.l.b16 %v303
    %v1658 = vunpack.c.l.b16 %v304
    %v1659 = vunpack.c.l.b16 %v305
    %v1660 = vunpack.c.l.b16 %v306
    %v1661 = vunpack.c.l.b16 %v307
    %v1662 = vunpack.c.l.b16 %v308
    %v1663 = vunpack.c.l.b16 %v309
    %v1664 = vunpack.c.l.b16 %v310
    %v1665 = vunpack.c.l.b16 %v311
    %v1666 = vunpack.c.l.b16 %v312
    %v1667 = vunpack.c.l.b16 %v313
    %v1668 = vunpack.c.l.b16 %v314
    %v1669 = vunpack.c.l.b16 %v315
    %v1670 = vunpack.c.l.b16 %v316
    %v1671 = vunpack.c.l.b16 %v317
    %v1672 = vunpack.c.l.b16 %v318
    %v1673 = vunpack.c.l.b16 %v319
    %v1674 = vunpack.c.l.b16 %v320
    %v1675 = vunpack.c.l.b16 %v321
    %v1676 = vunpack.c.l.b16 %v322
    %v1677 = vunpack.c.l.b16 %v323
    %v1678 = vunpack.c.l.b16 %v324
    %v1679 = vunpack.c.l.b16 %v325
    %v1680 = vunpack.c.l.b16 %v326
    %v1681 = vunpack.c.l.b16 %v327
    %v1682 = vunpack.c.l.b16 %v328
    %v1683 = vunpack.c.l.b16 %v329
    %v1684 = vunpack.c.l.b16 %v330
    %v1685 = vunpack.c.l.b16 %v331
    %v1686 = vunpack.c.l.b16 %v332
    %v1687 = vunpack.c.l.b16 %v333
    %v1688 = vunpack.c.l.b16 %v334
    %v1689 = vunpack.c.l.b16 %v335
    %v1690 = vunpack.c.l.b16 %v336
    %v1691 = vunpack.c.l.b16 %v337
    %v1692 = vunpack.c.l.b16 %v338
    %v1693 = vunpack.c.l.b16 %v339
    %v1694 = vunpack.c.l.b16 %v340
    %v1695 = vunpack.c.l.b16 %v341
    %v1696 = vunpack.c.l.b16 %v342
    %v1697 = vunpack.c.l.b16 %v343
    %v1698 = vunpack.c.l.b16 %v344
    %v1699 = vunpack.c.l.b16 %v345
    %v1700 = vunpack.c.l.b16 %v346
    %v1701 = vunpack.c.l.b16 %v347
    %v1702 = vunpack.c.l.b16 %v348
    %v1703 = vunpack.c.l.b16 %v349
    %v1704 = vunpack.c.l.b16 %v350
    %v1705 = vunpack.c.l.b16 %v351
    %v1706 = vunpack.c.l.b16 %v352
    %v1707 = vunpack.c.l.b16 %v353
    %v1708 = vunpack.c.l.b16 %v354
    %v1709 = vunpack.c.l.b16 %v355
    %v1710 = vunpack.c.l.b16 %v356
    %v1711 = vunpack.c.l.b16 %v357
    %v1712 = vunpack.c.l.b16 %v358
    %v1713 = vunpack.c.l.b16 %v359
    %v1714 = vunpack.c.l.b16 %v360
    %v1715 = vunpack.c.l.b16 %v361
    %v1716 = vunpack.c.l.b16 %v362
    %v1717 = vunpack.c.l.b16 %v363
    %v1718 = vunpack.c.l.b16 %v364
    %v1719 = vunpack.c.l.b16 %v365
    %v1720 = vunpack.c.l.b16 %v366
    %v1721 = vunpack.c.l.b16 %v367
    %v1722 = vunpack.c.l.b16 %v368
    %v1723 = vunpack.c.l.b16 %v369
    %v1724 = vunpack.c.l.b16 %v370
    %v1725 = vunpack.c.l.b16 %v371
    %v1726 = vunpack.c.l.b16 %v372
    %v1727 = vunpack.c.l.b16 %v373
    %v1728 = vunpack.c.l.b16 %v374
    %v1729 = vunpack.c.l.b16 %v375
    %v1730 = vunpack.c.l.b16 %v376
    %v1731 = vunpack.c.l.b16 %v377
    %v1732 = vunpack.c.l.b16 %v378
    %v1733 = vunpack.c.l.b16 %v379
    %v1734 = vunpack.c.l.b16 %v380
    %v1735 = vunpack.c.l.b16 %v381
    %v1736 = vunpack.c.l.b16 %v382
    %v1737 = vunpack.c.l.b16 %v383
    %v1738 = vunpack.c.l.b16 %v384
    %v1739 = vunpack.c.l.b16 %v385
    %v1740 = vunpack.c.l.b16 %v386
    %v1741 = vunpack.c.l.b16 %v387
    %v1742 = vunpack.c.l.b16 %v388
    %v1743 = vunpack.c.l.b16 %v389
    %v1744 = vunpack.c.l.b16 %v390
    %v1745 = vunpack.c.l.b16 %v391
    %v1746 = vunpack.c.l.b16 %v392
    %v1747 = vunpack.c.l.b16 %v393
    %v1748 = vunpack.c.l.b16 %v394
    %v1749 = vunpack.c.l.b16 %v395
    %v1750 = vunpack.c.l.b16 %v396
    %v1751 = vunpack.c.l.b16 %v397
    %v1752 = vunpack.c.l.b16 %v398
    %v1753 = vunpack.c.l.b16 %v399
    %v1754 = vunpack.c.l.b16 %v400
    %v1755 = vunpack.c.l.b16 %v401
    %v1756 = vunpack.c.l.b16 %v402
    %v1757 = vunpack.c.l.b16 %v403
    %v1758 = vunpack.c.l.b16 %v404
    %v1759 = vunpack.c.l.b16 %v405
    %v1760 = vunpack.c.l.b16 %v406
    %v1761 = vunpack.c.l.b16 %v407
    %v1762 = vunpack.c.l.b16 %v408
    %v1763 = vunpack.c.l.b16 %v409
    %v1764 = vunpack.c.l.b16 %v410
    %v1765 = vunpack.c.l.b16 %v411
    %v1766 = vunpack.c.l.b16 %v412
    %v1767 = vunpack.c.l.b16 %v413
    %v1768 = vunpack.c.l.b16 %v414
    %v1769 = vunpack.c.l.b16 %v415
    %v1770 = vunpack.c.l.b16 %v416
    %v1771 = vunpack.c.l.b16 %v417
    %v1772 = vunpack.c.l.b16 %v418
    %v1773 = vunpack.c.l.b16 %v419
    %v1774 = vunpack.c.l.b16 %v420
    %v1775 = vunpack.c.l.b16 %v421
    %v1776 = vunpack.c.l.b16 %v422
    %v1777 = vunpack.c.l.b16 %v423
    %v1778 = vunpack.c.l.b16 %v424
    %v1779 = vunpack.c.l.b16 %v425
    %v1780 = vunpack.c.l.b16 %v426
    %v1781 = vunpack.c.l.b16 %v427
    %v1782 = vunpack.c.l.b16 %v428
    %v1783 = vunpack.c.l.b16 %v429
    %v1784 = vunpack.c.l.b16 %v430
    %v1785 = vunpack.c.l.b16 %v431
    %v1786 = vunpack.c.l.b16 %v432
    %v1787 = vunpack.c.l.b16 %v433
    %v1788 = vunpack.c.l.b16 %v434
    %v1789 = vunpack.c.l.b16 %v435
    %v1790 = vunpack.c.l.b16 %v436
    %v1791 = vunpack.c.l.b16 %v437
    %v1792 = vunpack.c.l.b16 %v438
    %v1793 = vunpack.c.l.b16 %v439
    %v1794 = vunpack.c.l.b16 %v440
    %v1795 = vunpack.c.l.b16 %v441
    %v1796 = vunpack.c.l.b16 %v442
    %v1797 = vunpack.c.l.b16 %v443
    %v1798 = vunpack.c.l.b16 %v444
    %v1799 = vunpack.c.l.b16 %v445
    %v1800 = vunpack.c.l.b16 %v446
    %v1801 = vunpack.c.l.b16 %v447
    %v1802 = vunpack.c.l.b16 %v448
    %v1803 = vunpack.c.l.b16 %v449
    %v1804 = vunpack.c.l.b16 %v450
    %v1805 = vunpack.c.l.b16 %v451
    %v1806 = vunpack.c.l.b16 %v452
    %v1807 = vunpack.c.l.b16 %v453
    %v1808 = vunpack.c.l.b16 %v454
    %v1809 = vunpack.c.l.b16 %v455
    %v1810 = vunpack.c.l.b16 %v456
    %v1811 = vunpack.c.l.b16 %v457
    %v1812 = vunpack.c.l.b16 %v458
    %v1813 = vunpack.c.l.b16 %v459
    %v1814 = vunpack.c.l.b16 %v460
    %v1815 = vunpack.c.l.b16 %v461
    %v1816 = vunpack.c.l.b16 %v462
    %v1817 = vunpack.c.l.b16 %v463
    %v1818 = vunpack.c.l.b16 %v464
    %v1819 = vunpack.c.l.b16 %v465
    %v1820 = vunpack.c.l.b16 %v466
    %v1821 = vunpack.c.l.b16 %v467
    %v1822 = vunpack.c.l.b16 %v468
    %v1823 = vunpack.c.l.b16 %v469
    %v1824 = vunpack.c.l.b16 %v470
    %v1825 = vunpack.c.l.b16 %v471
    %v1826 = vunpack.c.l.b16 %v472
    %v1827 = vunpack.c.l.b16 %v473
    %v1828 = vunpack.c.l.b16 %v474
    %v1829 = vunpack.c.l.b16 %v475
    %v1830 = vunpack.c.l.b16 %v476
    %v1831 = vunpack.c.l.b16 %v477
    %v1832 = vunpack.c.l.b16 %v478
    %v1833 = vunpack.c.l.b16 %v479
    %v1834 = vunpack.c.l.b16 %v480
    %v1835 = vunpack.c.l.b16 %v481
    %v1836 = vunpack.c.l.b16 %v482
    %v1837 = vunpack.c.l.b16 %v483
    %v1838 = vunpack.c.l.b16 %v484
    %v1839 = vunpack.c.l.b16 %v485
    %v1840 = vunpack.c.l.b16 %v486
    %v1841 = vunpack.c.l.b16 %v487
    %v1842 = vunpack.c.l.b16 %v488
    %v1843 = vunpack.c.l.b16 %v489
    %v1844 = vunpack.c.l.b16 %v490
    %v1845 = vunpack.c.l.b16 %v491
    %v1846 = vunpack.c.l.b16 %v492
    %v1847 = vunpack.c.l.b16 %v493
    %v1848 = vunpack.c.l.b16 %v494
    %v1849 = vunpack.c.l.b16 %v495
    %v1850 = vunpack.c.l.b16 %v496
    %v1851 = vunpack.c.l.b16 %v497
    %v1852 = vunpack.c.l.b16 %v498
    %v1853 = vunpack.c.l.b16 %v499
    %v1854 = vunpack.c.l.b16 %v500
    %v1855 = vunpack.c.l.b16 %v501
    %v1856 = vunpack.c.l.b16 %v502
    %v1857 = vunpack.c.l.b16 %v503
    %v1858 = vunpack.c.l.b16 %v504
    %v1859 = vunpack.c.l.b16 %v505
    %v1860 = vunpack.c.l.b16 %v506
    %v1861 = vunpack.c.l.b16 %v507
    %v1862 = vunpack.c.l.b16 %v508
    %v1863 = vunpack.c.l.b16 %v509
    %v1864 = vunpack.c.l.b16 %v510
    %v1865 = vunpack.c.l.b16 %v511
    %v1866 = vunpack.c.l.b16 %v512
    %v1867 = vunpack.c.l.b16 %v513
    %v1868 = vunpack.c.l.b16 %v514
    %v1869 = vunpack.c.l.b16 %v515
    %v1870 = vunpack.c.l.b16 %v516
    %v1871 = vunpack.c.l.b16 %v517
    %v1872 = vunpack.c.l.b16 %v518
    %v1873 = vunpack.c.l.b16 %v519
    %v1874 = vunpack.c.l.b16 %v520
    %v1875 = vunpack.c.l.b16 %v521
    %v1876 = vunpack.c.l.b16 %v522
    %v1877 = vunpack.c.l.b16 %v523
    %v1878 = vunpack.c.l.b16 %v524
    %v1879 = vunpack.c.l.b16 %v525
    %v1880 = vunpack.c.l.b16 %v526
    %v1881 = vunpack.c.l.b16 %v527
    %v1882 = vunpack.c.l.b16 %v528
    %v1883 = vunpack.c.l.b16 %v529
    %v1884 = vunpack.c.l.b16 %v530
    %v1885 = vunpack.c.l.b16 %v531
    %v1886 = vunpack.c.l.b16 %v532
    %v1887 = vunpack.c.l.b16 %v533
    %v1888 = vunpack.c.l.b16 %v534
    %v1889 = vunpack.c.l.b16 %v535
    %v1890 = vunpack.c.l.b16 %v536
    %v1891 = vunpack.c.l.b16 %v537
    %v1892 = vunpack.c.l.b16 %v538
    %v1893 = vunpack.c.l.b16 %v539
    %v1894 = vunpack.c.l.b16 %v540
    %v1895 = vunpack.c.l.b16 %v541
    %v1896 = vunpack.c.l.b16 %v542
    %v1897 = vunpack.c.l.b16 %v543
    %v1898 = vunpack.c.l.b16 %v544
    %v1899 = vunpack.c.l.b16 %v545
    %v1900 = vunpack.c.l.b16 %v546
    %v1901 = vunpack.c.l.b16 %v547
    %v1902 = vunpack.c.l.b16 %v548
    %v1903 = vunpack.c.l.b16 %v549
    %v1904 = vunpack.c.l.b16 %v550
    %v1905 = vunpack.c.l.b16 %v551
    %v1906 = vunpack.c.l.b16 %v552
    %v1907 = vunpack.c.l.b16 %v553
    %v1908 = vunpack.c.l.b16 %v554
    %v1909 = vunpack.c.l.b16 %v555
    %v1910 = vunpack.c.l.b16 %v556
    %v1911 = vunpack.c.l.b16 %v557
    %v1912 = vunpack.c.l.b16 %v558
    %v1913 = vunpack.c.l.b16 %v559
    %v1914 = vunpack.c.l.b16 %v560
    %v1915 = vunpack.c.l.b16 %v561
    %v1916 = vunpack.c.l.b16 %v562
    %v1917 = vunpack.c.l.b16 %v563
    %v1918 = vunpack.c.l.b16 %v564
    %v1919 = vunpack.c.l.b16 %v565
    %v1920 = vunpack.c.l.b16 %v566
    %v1921 = vunpack.c.l.b16 %v567
    %v1922 = vunpack.c.l.b16 %v568
    %v1923 = vunpack.c.l.b16 %v569
    %v1924 = vunpack.c.l.b16 %v570
    %v1925 = vunpack.c.l.b16 %v571
    %v1926 = vunpack.c.l.b16 %v572
    %v1927 = vunpack.c.l.b16 %v573
    %v1928 = vunpack.c.l.b16 %v574
    %v1929 = vunpack.c.l.b16 %v575
    %v1930 = vunpack.c.l.b16 %v576
    %v1931 = vunpack.c.l.b16 %v577
    %v1932 = vunpack.c.l.b16 %v578
    %v1933 = vunpack.c.l.b16 %v579
    %v1934 = vunpack.c.l.b16 %v580
    %v1935 = vunpack.c.l.b16 %v581
    %v1936 = vunpack.c.l.b16 %v582
    %v1937 = vunpack.c.l.b16 %v583
    %v1938 = vunpack.c.l.b16 %v584
    %v1939 = vunpack.c.l.b16 %v585
    %v1940 = vunpack.c.l.b16 %v586
    %v1941 = vunpack.c.l.b16 %v587
    %v1942 = vunpack.c.l.b16 %v588
    %v1943 = vunpack.c.l.b16 %v589
    %v1944 = vunpack.c.l.b16 %v590
    %v1945 = vunpack.c.l.b16 %v591
    %v1946 = vunpack.c.l.b16 %v592
    %v1947 = vunpack.c.l.b16 %v593
    %v1948 = vunpack.c.l.b16 %v594
    %v1949 = vunpack.c.l.b16 %v595
    %v1950 = vunpack.c.l.b16 %v596
    %v1951 = vunpack.c.l.b16 %v597
    %v1952 = vunpack.c.l.b16 %v598
    %v1953 = vunpack.c.l.b16 %v599
    %v1954 = vunpack.c.l.b16 %v600
    %v1955 = vunpack.c.l.b16 %v601
    %v1956 = vunpack.c.l.b16 %v602
    %v1957 = vunpack.c.l.b16 %v603
    %v1958 = vunpack.c.l.b16 %v604
    %v1959 = vunpack.c.l.b16 %v605
    %v1960 = vunpack.c.l.b16 %v606
    %v1961 = vunpack.c.l.b16 %v607
    %v1962 = vunpack.c.l.b16 %v608
    %v1963 = vunpack.c.l.b16 %v609
    %v1964 = vunpack.c.l.b16 %v610
    %v1965 = vunpack.c.l.b16 %v611
    %v1966 = vunpack.c.l.b16 %v612
    %v1967 = vunpack.c.l.b16 %v613
    %v1968 = vunpack.c.l.b16 %v614
    %v1969 = vunpack.c.l.b16 %v615
    %v1970 = vunpack.c.l.b16 %v616
    %v1971 = vunpack.c.l.b16 %v617
    %v1972 = vunpack.c.l.b16 %v618
    %v1973 = vunpack.c.l.b16 %v619
    %v1974 = vunpack.c.l.b16 %v620
    %v1975 = vunpack.c.l.b16 %v621
    %v1976 = vunpack.c.l.b16 %v622
    %v1977 = vunpack.c.l.b16 %v623
    %v1978 = vunpack.c.l.b16 %v624
    %v1979 = vunpack.c.l.b16 %v625
    %v1980 = vunpack.c.l.b16 %v626
    %v1981 = vunpack.c.l.b16 %v627
    %v1982 = vunpack.c.l.b16 %v628
    %v1983 = vunpack.c.l.b16 %v629
    %v1984 = vunpack.c.l.b16 %v630
    %v1985 = vunpack.c.l.b16 %v631
    %v1986 = vunpack.c.l.b16 %v632
    %v1987 = vunpack.c.l.b16 %v633
    %v1988 = vunpack.c.l.b16 %v634
    %v1989 = vunpack.c.l.b16 %v635
    %v1990 = vunpack.c.l.b16 %v636
    %v1991 = vunpack.c.l.b16 %v637
    %v1992 = vunpack.c.l.b16 %v638
    %v1993 = vunpack.c.l.b16 %v639
    %v1994 = vunpack.c.l.b16 %v640
    %v1995 = vunpack.c.l.b16 %v641
    %v1996 = vunpack.c.l.b16 %v642
    %v1997 = vunpack.c.l.b16 %v643
    %v1998 = vunpack.c.l.b16 %v644
    %v1999 = vunpack.c.l.b16 %v645
    %v2000 = vunpack.c.l.b16 %v646
    %v2001 = vunpack.c.l.b16 %v647
    %v2002 = vunpack.c.l.b16 %v648
    %v2003 = vunpack.c.l.b16 %v649
    %v2004 = vunpack.c.l.b16 %v650
    %v2005 = vunpack.c.l.b16 %v651
    %v2006 = vunpack.c.l.b16 %v652
    %v2007 = vunpack.c.l.b16 %v653
    %v2008 = vunpack.c.l.b16 %v654
    %v2009 = vunpack.c.l.b16 %v655
    %v2010 = vunpack.c.l.b16 %v656
    %v2011 = vunpack.c.l.b16 %v657
    %v2012 = vunpack.c.l.b16 %v658
    %v2013 = vunpack.c.l.b16 %v659
    %v2014 = vunpack.c.l.b16 %v660
    %v2015 = vunpack.c.l.b16 %v661
    %v2016 = vunpack.c.l.b16 %v662
    %v2017 = vunpack.c.l.b16 %v663
    %v2018 = vunpack.c.l.b16 %v664
    %v2019 = vunpack.c.l.b16 %v665
    %v2020 = vunpack.c.l.b16 %v666
    %v2021 = vunpack.c.l.b16 %v667
    %v2022 = vunpack.c.l.b16 %v668
    %v2023 = vunpack.c.l.b16 %v669
    %v2024 = vunpack.c.l.b16 %v670
    %v2025 = vunpack.c.l.b16 %v671
    %v2026 = vunpack.c.l.b16 %v672
    %v2027 = vunpack.c.l.b16 %v673
    %v2028 = vunpack.c.l.b16 %v674
    %v2029 = vunpack.c.l.b16 %v675
    %v2030 = vunpack.c.l.b16 %v676
    %v2031 = vunpack.c.l.b16 %v677
    %v2032 = vunpack.c.l.b16 %v678
    %v2033 = vunpack.c.l.b16 %v679
    %v2034 = vunpack.c.l.b16 %v680
    %v2035 = vunpack.c.l.b16 %v681
    %v2036 = vunpack.c.l.b16 %v682
    %v2037 = vunpack.c.l.b16 %v683
    %v2038 = vunpack.c.l.b16 %v684
    %v2039 = vunpack.c.l.b16 %v685
    %v2040 = vunpack.c.l.b16 %v686
    %v2041 = vunpack.c.l.b16 %v687
    %v2042 = vunpack.c.l.b16 %v688
    %v2043 = vunpack.c.l.b16 %v689
    %v2044 = vunpack.c.l.b16 %v690
    %v2045 = vunpack.c.l.b16 %v691
    %v2046 = vunpack.c.l.b16 %v692
    %v2047 = vunpack.c.l.b16 %v693
    %v2048 = vunpack.c.l.b16 %v694
    %v2049 = vunpack.c.l.b16 %v695
    %v2050 = vunpack.c.l.b16 %v696
    %v2051 = vunpack.c.l.b16 %v697
    %v2052 = vunpack.c.l.b16 %v698
    %v2053 = vunpack.c.l.b16 %v699
    %v2054 = vunpack.c.l.b16 %v700
    %v2055 = vunpack.c.l.b16 %v701
    %v2056 = vunpack.c.l.b16 %v702
    %v2057 = vunpack.c.l.b16 %v703
    %v2058 = vunpack.c.l.b16 %v704
    %v2059 = vunpack.c.l.b16 %v705
    %v2060 = vunpack.c.l.b16 %v706
    %v2061 = vunpack.c.l.b16 %v707
    %v2062 = vunpack.c.l.b16 %v708
    %v2063 = vunpack.c.l.b16 %v709
    %v2064 = vunpack.c.l.b16 %v710
    %v2065 = vunpack.c.l.b16 %v711
    %v2066 = vunpack.c.l.b16 %v712
    %v2067 = vpack.c.b16 %v1460, %v1459
    %v2068 = vpack.c.b16 %v1462, %v1461
    %v2069 = vpack.c.b16 %v1464, %v1463
    %v2070 = vpack.c.b16 %v1466, %v1465
    %v2071 = vpack.c.b16 %v1468, %v1467
    %v2072 = vpack.c.b16 %v1470, %v1469
    %v2073 = vpack.c.b16 %v1472, %v1471
    %v2074 = vpack.c.b16 %v1474, %v1473
    %v2075 = vpack.c.b16 %v1476, %v1475
    %v2076 = vpack.c.b16 %v1478, %v1477
    %v2077 = vpack.c.b16 %v1480, %v1479
    %v2078 = vpack.c.b16 %v1482, %v1481
    %v2079 = vpack.c.b16 %v1484, %v1483
    %v2080 = vpack.c.b16 %v1486, %v1485
    %v2081 = vpack.c.b16 %v1488, %v1487
    %v2082 = vpack.c.b16 %v1490, %v1489
    %v2083 = vpack.c.b16 %v1492, %v1491
    %v2084 = vpack.c.b16 %v1494, %v1493
    %v2085 = vpack.c.b16 %v1496, %v1495
    %v2086 = vpack.c.b16 %v1498, %v1497
    %v2087 = vpack.c.b16 %v1500, %v1499
    %v2088 = vpack.c.b16 %v1502, %v1501
    %v2089 = vpack.c.b16 %v1504, %v1503
    %v2090 = vpack.c.b16 %v1506, %v1505
    %v2091 = vpack.c.b16 %v1508, %v1507
    %v2092 = vpack.c.b16 %v1510, %v1509
    %v2093 = vpack.c.b16 %v1512, %v1511
    %v2094 = vpack.c.b16 %v1514, %v1513
    %v2095 = vpack.c.b16 %v1516, %v1515
    %v2096 = vpack.c.b16 %v1518, %v1517
    %v2097 = vpack.c.b16 %v1520, %v1519
    %v2098 = vpack.c.b16 %v1522, %v1521
    %v2099 = vpack.c.b16 %v1524, %v1523
    %v2100 = vpack.c.b16 %v1526, %v1525
    %v2101 = vpack.c.b16 %v1528, %v1527
    %v2102 = vpack.c.b16 %v1530, %v1529
    %v2103 = vpack.c.b16 %v1532, %v1531
    %v2104 = vpack.c.b16 %v1534, %v1533
    %v2105 = vpack.c.b16 %v1536, %v1535
    %v2106 = vpack.c.b16 %v1538, %v1537
    %v2107 = vpack.c.b16 %v1540, %v1539
    %v2108 = vpack.c.b16 %v1542, %v1541
    %v2109 = vpack.c.b16 %v1544, %v1543
    %v2110 = vpack.c.b16 %v1546, %v1545
    %v2111 = vpack.c.b16 %v1548, %v1547
    %v2112 = vpack.c.b16 %v1550, %v1549
    %v2113 = vpack.c.b16 %v1552, %v1551
    %v2114 = vpack.c.b16 %v1554, %v1553
    %v2115 = vpack.c.b16 %v1556, %v1555
    %v2116 = vpack.c.b16 %v1558, %v1557
    %v2117 = vpack.c.b16 %v1560, %v1559
    %v2118 = vpack.c.b16 %v1562, %v1561
    %v2119 = vpack.c.b16 %v1564, %v1563
    %v2120 = vpack.c.b16 %v1566, %v1565
    %v2121 = vpack.c.b16 %v1568, %v1567
    %v2122 = vpack.c.b16 %v1570, %v1569
    %v2123 = vpack.c.b16 %v1572, %v1571
    %v2124 = vpack.c.b16 %v1574, %v1573
    %v2125 = vpack.c.b16 %v1576, %v1575
    %v2126 = vpack.c.b16 %v1578, %v1577
    %v2127 = vpack.c.b16 %v1580, %v1579
    %v2128 = vpack.c.b16 %v1582, %v1581
    %v2129 = vpack.c.b16 %v1584, %v1583
    %v2130 = vpack.c.b16 %v1586, %v1585
    %v2131 = vpack.c.b16 %v1588, %v1587
    %v2132 = vpack.c.b16 %v1590, %v1589
    %v2133 = vpack.c.b16 %v1592, %v1591
    %v2134 = vpack.c.b16 %v1594, %v1593
    %v2135 = vpack.c.b16 %v1596, %v1595
    %v2136 = vpack.c.b16 %v1598, %v1597
    %v2137 = vpack.c.b16 %v1600, %v1599
    %v2138 = vpack.c.b16 %v1602, %v1601
    %v2139 = vpack.c.b16 %v1604, %v1603
    %v2140 = vpack.c.b16 %v1606, %v1605
    %v2141 = vpack.c.b16 %v1608, %v1607
    %v2142 = vpack.c.b16 %v1610, %v1609
    %v2143 = vpack.c.b16 %v1612, %v1611
    %v2144 = vpack.c.b16 %v1614, %v1613
    %v2145 = vpack.c.b16 %v1616, %v1615
    %v2146 = vpack.c.b16 %v1618, %v1617
    %v2147 = vpack.c.b16 %v1620, %v1619
    %v2148 = vpack.c.b16 %v1622, %v1621
    %v2149 = vpack.c.b16 %v1624, %v1623
    %v2150 = vpack.c.b16 %v1626, %v1625
    %v2151 = vpack.c.b16 %v1628, %v1627
    %v2152 = vpack.c.b16 %v1630, %v1629
    %v2153 = vpack.c.b16 %v1632, %v1631
    %v2154 = vpack.c.b16 %v1634, %v1633
    %v2155 = vpack.c.b16 %v1636, %v1635
    %v2156 = vpack.c.b16 %v1638, %v1637
    %v2157 = vpack.c.b16 %v1640, %v1639
    %v2158 = vpack.c.b16 %v1642, %v1641
    %v2159 = vpack.c.b16 %v1644, %v1643
    %v2160 = vpack.c.b16 %v1646, %v1645
    %v2161 = vpack.c.b16 %v1648, %v1647
    %v2162 = vpack.c.b16 %v1650, %v1649
    %v2163 = vpack.c.b16 %v1652, %v1651
    %v2164 = vpack.c.b16 %v1654, %v1653
    %v2165 = vpack.c.b16 %v1656, %v1655
    %v2166 = vpack.c.b16 %v1658, %v1657
    %v2167 = vpack.c.b16 %v1660, %v1659
    %v2168 = vpack.c.b16 %v1662, %v1661
    %v2169 = vpack.c.b16 %v1664, %v1663
    %v2170 = vpack.c.b16 %v1666, %v1665
    %v2171 = vpack.c.b16 %v1668, %v1667
    %v2172 = vpack.c.b16 %v1670, %v1669
    %v2173 = vpack.c.b16 %v1672, %v1671
    %v2174 = vpack.c.b16 %v1674, %v1673
    %v2175 = vpack.c.b16 %v1676, %v1675
    %v2176 = vpack.c.b16 %v1678, %v1677
    %v2177 = vpack.c.b16 %v1680, %v1679
    %v2178 = vpack.c.b16 %v1682, %v1681
    %v2179 = vpack.c.b16 %v1684, %v1683
    %v2180 = vpack.c.b16 %v1686, %v1685
    %v2181 = vpack.c.b16 %v1688, %v1687
    %v2182 = vpack.c.b16 %v1690, %v1689
    %v2183 = vpack.c.b16 %v1692, %v1691
    %v2184 = vpack.c.b16 %v1694, %v1693
    %v2185 = vpack.c.b16 %v1696, %v1695
    %v2186 = vpack.c.b16 %v1698, %v1697
    %v2187 = vpack.c.b16 %v1700, %v1699
    %v2188 = vpack.c.b16 %v1702, %v1701
    %v2189 = vpack.c.b16 %v1704, %v1703
    %v2190 = vpack.c.b16 %v1706, %v1705
    %v2191 = vpack.c.b16 %v1708, %v1707
    %v2192 = vpack.c.b16 %v1710, %v1709
    %v2193 = vpack.c.b16 %v1712, %v1711
    %v2194 = vpack.c.b16 %v1714, %v1713
    %v2195 = vpack.c.b16 %v1716, %v1715
    %v2196 = vpack.c.b16 %v1718, %v1717
    %v2197 = vpack.c.b16 %v1720, %v1719
    %v2198 = vpack.c.b16 %v1722, %v1721
    %v2199 = vpack.c.b16 %v1724, %v1723
    %v2200 = vpack.c.b16 %v1726, %v1725
    %v2201 = vpack.c.b16 %v1728, %v1727
    %v2202 = vpack.c.b16 %v1730, %v1729
    %v2203 = vpack.c.b16 %v1732, %v1731
    %v2204 = vpack.c.b16 %v1734, %v1733
    %v2205 = vpack.c.b16 %v1736, %v1735
    %v2206 = vpack.c.b16 %v1738, %v1737
    %v2207 = vpack.c.b16 %v1740, %v1739
    %v2208 = vpack.c.b16 %v1742, %v1741
    %v2209 = vpack.c.b16 %v1744, %v1743
    %v2210 = vpack.c.b16 %v1746, %v1745
    %v2211 = vpack.c.b16 %v1748, %v1747
    %v2212 = vpack.c.b16 %v1750, %v1749
    %v2213 = vpack.c.b16 %v1752, %v1751
    %v2214 = vpack.c.b16 %v1754, %v1753
    %v2215 = vpack.c.b16 %v1756, %v1755
    %v2216 = vpack.c.b16 %v1758, %v1757
    %v2217 = vpack.c.b16 %v1760, %v1759
    %v2218 = vpack.c.b16 %v1762, %v1761
    %v2219 = vpack.c.b16 %v1764, %v1763
    %v2220 = vpack.c.b16 %v1766, %v1765
    %v2221 = vpack.c.b16 %v1768, %v1767
    %v2222 = vpack.c.b16 %v1770, %v1769
    %v2223 = vpack.c.b16 %v1772, %v1771
    %v2224 = vpack.c.b16 %v1774, %v1773
    %v2225 = vpack.c.b16 %v1776, %v1775
    %v2226 = vpack.c.b16 %v1778, %v1777
    %v2227 = vpack.c.b16 %v1780, %v1779
    %v2228 = vpack.c.b16 %v1782, %v1781
    %v2229 = vpack.c.b16 %v1784, %v1783
    %v2230 = vpack.c.b16 %v1786, %v1785
    %v2231 = vpack.c.b16 %v1788, %v1787
    %v2232 = vpack.c.b16 %v1790, %v1789
    %v2233 = vpack.c.b16 %v1792, %v1791
    %v2234 = vpack.c.b16 %v1794, %v1793
    %v2235 = vpack.c.b16 %v1796, %v1795
    %v2236 = vpack.c.b16 %v1798, %v1797
    %v2237 = vpack.c.b16 %v1800, %v1799
    %v2238 = vpack.c.b16 %v1802, %v1801
    %v2239 = vpack.c.b16 %v1804, %v1803
    %v2240 = vpack.c.b16 %v1806, %v1805
    %v2241 = vpack.c.b16 %v1808, %v1807
    %v2242 = vpack.c.b16 %v1810, %v1809
    %v2243 = vpack.c.b16 %v1812, %v1811
    %v2244 = vpack.c.b16 %v1814, %v1813
    %v2245 = vpack.c.b16 %v1816, %v1815
    %v2246 = vpack.c.b16 %v1818, %v1817
    %v2247 = vpack.c.b16 %v1820, %v1819
    %v2248 = vpack.c.b16 %v1822, %v1821
    %v2249 = vpack.c.b16 %v1824, %v1823
    %v2250 = vpack.c.b16 %v1826, %v1825
    %v2251 = vpack.c.b16 %v1828, %v1827
    %v2252 = vpack.c.b16 %v1830, %v1829
    %v2253 = vpack.c.b16 %v1832, %v1831
    %v2254 = vpack.c.b16 %v1834, %v1833
    %v2255 = vpack.c.b16 %v1836, %v1835
    %v2256 = vpack.c.b16 %v1838, %v1837
    %v2257 = vpack.c.b16 %v1840, %v1839
    %v2258 = vpack.c.b16 %v1842, %v1841
    %v2259 = vpack.c.b16 %v1844, %v1843
    %v2260 = vpack.c.b16 %v1846, %v1845
    %v2261 = vpack.c.b16 %v1848, %v1847
    %v2262 = vpack.c.b16 %v1850, %v1849
    %v2263 = vpack.c.b16 %v1852, %v1851
    %v2264 = vpack.c.b16 %v1854, %v1853
    %v2265 = vpack.c.b16 %v1856, %v1855
    %v2266 = vpack.c.b16 %v1858, %v1857
    %v2267 = vpack.c.b16 %v1860, %v1859
    %v2268 = vpack.c.b16 %v1862, %v1861
    %v2269 = vpack.c.b16 %v1864, %v1863
    %v2270 = vpack.c.b16 %v1866, %v1865
    %v2271 = vpack.c.b16 %v1868, %v1867
    %v2272 = vpack.c.b16 %v1870, %v1869
    %v2273 = vpack.c.b16 %v1872, %v1871
    %v2274 = vpack.c.b16 %v1874, %v1873
    %v2275 = vpack.c.b16 %v1876, %v1875
    %v2276 = vpack.c.b16 %v1878, %v1877
    %v2277 = vpack.c.b16 %v1880, %v1879
    %v2278 = vpack.c.b16 %v1882, %v1881
    %v2279 = vpack.c.b16 %v1884, %v1883
    %v2280 = vpack.c.b16 %v1886, %v1885
    %v2281 = vpack.c.b16 %v1888, %v1887
    %v2282 = vpack.c.b16 %v1890, %v1889
    %v2283 = vpack.c.b16 %v1892, %v1891
    %v2284 = vpack.c.b16 %v1894, %v1893
    %v2285 = vpack.c.b16 %v1896, %v1895
    %v2286 = vpack.c.b16 %v1898, %v1897
    %v2287 = vpack.c.b16 %v1900, %v1899
    %v2288 = vpack.c.b16 %v1902, %v1901
    %v2289 = vpack.c.b16 %v1904, %v1903
    %v2290 = vpack.c.b16 %v1906, %v1905
    %v2291 = vpack.c.b16 %v1908, %v1907
    %v2292 = vpack.c.b16 %v1910, %v1909
    %v2293 = vpack.c.b16 %v1912, %v1911
    %v2294 = vpack.c.b16 %v1914, %v1913
    %v2295 = vpack.c.b16 %v1916, %v1915
    %v2296 = vpack.c.b16 %v1918, %v1917
    %v2297 = vpack.c.b16 %v1920, %v1919
    %v2298 = vpack.c.b16 %v1922, %v1921
    %v2299 = vpack.c.b16 %v1924, %v1923
    %v2300 = vpack.c.b16 %v1926, %v1925
    %v2301 = vpack.c.b16 %v1928, %v1927
    %v2302 = vpack.c.b16 %v1930, %v1929
    %v2303 = vpack.c.b16 %v1932, %v1931
    %v2304 = vpack.c.b16 %v1934, %v1933
    %v2305 = vpack.c.b16 %v1936, %v1935
    %v2306 = vpack.c.b16 %v1938, %v1937
    %v2307 = vpack.c.b16 %v1940, %v1939
    %v2308 = vpack.c.b16 %v1942, %v1941
    %v2309 = vpack.c.b16 %v1944, %v1943
    %v2310 = vpack.c.b16 %v1946, %v1945
    %v2311 = vpack.c.b16 %v1948, %v1947
    %v2312 = vpack.c.b16 %v1950, %v1949
    %v2313 = vpack.c.b16 %v1952, %v1951
    %v2314 = vpack.c.b16 %v1954, %v1953
    %v2315 = vpack.c.b16 %v1956, %v1955
    %v2316 = vpack.c.b16 %v1958, %v1957
    %v2317 = vpack.c.b16 %v1960, %v1959
    %v2318 = vpack.c.b16 %v1962, %v1961
    %v2319 = vpack.c.b16 %v1964, %v1963
    %v2320 = vpack.c.b16 %v1966, %v1965
    %v2321 = vpack.c.b16 %v1968, %v1967
    %v2322 = vpack.c.b16 %v1970, %v1969
    %v2323 = vpack.c.b16 %v1972, %v1971
    %v2324 = vpack.c.b16 %v1974, %v1973
    %v2325 = vpack.c.b16 %v1976, %v1975
    %v2326 = vpack.c.b16 %v1978, %v1977
    %v2327 = vpack.c.b16 %v1980, %v1979
    %v2328 = vpack.c.b16 %v1982, %v1981
    %v2329 = vpack.c.b16 %v1984, %v1983
    %v2330 = vpack.c.b16 %v1986, %v1985
    %v2331 = vpack.c.b16 %v1988, %v1987
    %v2332 = vpack.c.b16 %v1990, %v1989
    %v2333 = vpack.c.b16 %v1992, %v1991
    %v2334 = vpack.c.b16 %v1994, %v1993
    %v2335 = vpack.c.b16 %v1996, %v1995
    %v2336 = vpack.c.b16 %v1998, %v1997
    %v2337 = vpack.c.b16 %v2000, %v1999
    %v2338 = vpack.c.b16 %v2002, %v2001
    %v2339 = vpack.c.b16 %v2004, %v2003
    %v2340 = vpack.c.b16 %v2006, %v2005
    %v2341 = vpack.c.b16 %v2008, %v2007
    %v2342 = vpack.c.b16 %v2010, %v2009
    %v2343 = vpack.c.b16 %v2012, %v2011
    %v2344 = vpack.c.b16 %v2014, %v2013
    %v2345 = vpack.c.b16 %v2016, %v2015
    %v2346 = vpack.c.b16 %v2018, %v2017
    %v2347 = vpack.c.b16 %v2020, %v2019
    %v2348 = vpack.c.b16 %v2022, %v2021
    %v2349 = vpack.c.b16 %v2024, %v2023
    %v2350 = vpack.c.b16 %v2026, %v2025
    %v2351 = vpack.c.b16 %v2028, %v2027
    %v2352 = vpack.c.b16 %v2030, %v2029
    %v2353 = vpack.c.b16 %v2032, %v2031
    %v2354 = vpack.c.b16 %v2034, %v2033
    %v2355 = vpack.c.b16 %v2036, %v2035
    %v2356 = vpack.c.b16 %v2038, %v2037
    %v2357 = vpack.c.b16 %v2040, %v2039
    %v2358 = vpack.c.b16 %v2042, %v2041
    %v2359 = vpack.c.b16 %v2044, %v2043
    %v2360 = vpack.c.b16 %v2046, %v2045
    %v2361 = vpack.c.b16 %v2048, %v2047
    %v2362 = vpack.c.b16 %v2050, %v2049
    %v2363 = vpack.c.b16 %v2052, %v2051
    %v2364 = vpack.c.b16 %v2054, %v2053
    %v2365 = vpack.c.b16 %v2056, %v2055
    %v2366 = vpack.c.b16 %v2058, %v2057
    %v2367 = vpack.c.b16 %v2060, %v2059
    %v2368 = vpack.c.b16 %v2062, %v2061
    %v2369 = vpack.c.b16 %v2064, %v2063
    %v2370 = vpack.c.b16 %v2066, %v2065
    %2675 = vmatprep.subr.bf16.mxu0 0
    %2676 = vmatpush1.bf16.msra.mxu0 %v2067
    %2677 = vmatprep.subr.bf16.mxu0 0
    %2678 = vmatpush1.bf16.msra.mxu0 %v2068
    %2679 = vmatprep.subr.bf16.mxu0 0
    %2680 = vmatpush1.bf16.msra.mxu0 %v2069
    %2681 = vmatprep.subr.bf16.mxu0 0
    %2682 = vmatpush1.bf16.msra.mxu0 %v2070
    %2683 = vmatprep.subr.bf16.mxu0 0
    %2684 = vmatpush1.bf16.msra.mxu0 %v2071
    %2685 = vmatprep.subr.bf16.mxu0 0
    %2686 = vmatpush1.bf16.msra.mxu0 %v2072
    %2687 = vmatprep.subr.bf16.mxu0 0
    %2688 = vmatpush1.bf16.msra.mxu0 %v2073
    %2689 = vmatprep.subr.bf16.mxu0 0
    %2690 = vmatpush1.bf16.msra.mxu0 %v2074
    %2691 = vmatprep.subr.bf16.mxu0 0
    %2692 = vmatpush1.bf16.msra.mxu0 %v2075
    %2693 = vmatprep.subr.bf16.mxu0 0
    %2694 = vmatpush1.bf16.msra.mxu0 %v2076
    %2695 = vmatprep.subr.bf16.mxu0 0
    %2696 = vmatpush1.bf16.msra.mxu0 %v2077
    %2697 = vmatprep.subr.bf16.mxu0 0
    %2698 = vmatpush1.bf16.msra.mxu0 %v2078
    %2699 = vmatprep.subr.bf16.mxu0 0
    %2700 = vmatpush1.bf16.msra.mxu0 %v2079
    %2701 = vmatprep.subr.bf16.mxu0 0
    %2702 = vmatpush1.bf16.msra.mxu0 %v2080
    %2703 = vmatprep.subr.bf16.mxu0 0
    %2704 = vmatpush1.bf16.msra.mxu0 %v2081
    %2705 = vmatprep.subr.bf16.mxu0 0
    %2706 = vmatpush1.bf16.msra.mxu0 %v2082
    %2707 = vmatprep.mubr.bf16.mxu0 %v776
    %2708 = vmatmul.mubr.bf16.gmra.mrb[0].mxu0 %v775
    %v2709 = vpop.f32.mrb[0].mxu0
    %v2710 = vadd.f32 %v717, %v2709
    %v2711 = vpop.f32.mrb[0].mxu0
    %v2712 = vpop.f32.mrb[0].mxu0
    %v2713 = vpop.f32.mrb[0].mxu0
    %2714 = vdwg.mxu0
    %2715 = vmatprep.subr.bf16.mxu0 0
    %2716 = vmatpush1.bf16.msra.mxu0 %v2083
    %2717 = vmatprep.subr.bf16.mxu0 0
    %2718 = vmatpush1.bf16.msra.mxu0 %v2084
    %2719 = vmatprep.subr.bf16.mxu0 0
    %2720 = vmatpush1.bf16.msra.mxu0 %v2085
    %2721 = vmatprep.subr.bf16.mxu0 0
    %2722 = vmatpush1.bf16.msra.mxu0 %v2086
    %2723 = vmatprep.subr.bf16.mxu0 0
    %2724 = vmatpush1.bf16.msra.mxu0 %v2087
    %2725 = vmatprep.subr.bf16.mxu0 0
    %2726 = vmatpush1.bf16.msra.mxu0 %v2088
    %2727 = vmatprep.subr.bf16.mxu0 0
    %2728 = vmatpush1.bf16.msra.mxu0 %v2089
    %2729 = vmatprep.subr.bf16.mxu0 0
    %2730 = vmatpush1.bf16.msra.mxu0 %v2090
    %2731 = vmatprep.subr.bf16.mxu0 0
    %2732 = vmatpush1.bf16.msra.mxu0 %v2091
    %2733 = vmatprep.subr.bf16.mxu0 0
    %2734 = vmatpush1.bf16.msra.mxu0 %v2092
    %2735 = vmatprep.subr.bf16.mxu0 0
    %2736 = vmatpush1.bf16.msra.mxu0 %v2093
    %2737 = vmatprep.subr.bf16.mxu0 0
    %2738 = vmatpush1.bf16.msra.mxu0 %v2094
    %2739 = vmatprep.subr.bf16.mxu0 0
    %2740 = vmatpush1.bf16.msra.mxu0 %v2095
    %2741 = vmatprep.subr.bf16.mxu0 0
    %2742 = vmatpush1.bf16.msra.mxu0 %v2096
    %2743 = vmatprep.subr.bf16.mxu0 0
    %2744 = vmatpush1.bf16.msra.mxu0 %v2097
    %2745 = vmatprep.subr.bf16.mxu0 0
    %2746 = vmatpush1.bf16.msra.mxu0 %v2098
    %2747 = vmatprep.mubr.bf16.mxu0 %v778
    %2748 = vmatmul.mubr.bf16.gmra.mrb[0].mxu0 %v777
    %v2749 = vpop.f32.mrb[0].mxu0
    %v2750 = vadd.f32 %v2710, %v2749
    %v2751 = vpop.f32.mrb[0].mxu0
    %v2752 = vpop.f32.mrb[0].mxu0
    %v2753 = vpop.f32.mrb[0].mxu0
    %2754 = vdwg.mxu0
    %2755 = vmatprep.subr.bf16.mxu0 0
    %2756 = vmatpush1.bf16.msra.mxu0 %v2099
    %2757 = vmatprep.subr.bf16.mxu0 0
    %2758 = vmatpush1.bf16.msra.mxu0 %v2100
    %2759 = vmatprep.subr.bf16.mxu0 0
    %2760 = vmatpush1.bf16.msra.mxu0 %v2101
    %2761 = vmatprep.subr.bf16.mxu0 0
    %2762 = vmatpush1.bf16.msra.mxu0 %v2102
    %2763 = vmatprep.subr.bf16.mxu0 0
    %2764 = vmatpush1.bf16.msra.mxu0 %v2103
    %2765 = vmatprep.subr.bf16.mxu0 0
    %2766 = vmatpush1.bf16.msra.mxu0 %v2104
    %2767 = vmatprep.subr.bf16.mxu0 0
    %2768 = vmatpush1.bf16.msra.mxu0 %v2105
    %2769 = vmatprep.subr.bf16.mxu0 0
    %2770 = vmatpush1.bf16.msra.mxu0 %v2106
    %2771 = vmatprep.subr.bf16.mxu0 0
    %2772 = vmatpush1.bf16.msra.mxu0 %v2107
    %2773 = vmatprep.subr.bf16.mxu0 0
    %2774 = vmatpush1.bf16.msra.mxu0 %v2108
    %2775 = vmatprep.subr.bf16.mxu0 0
    %2776 = vmatpush1.bf16.msra.mxu0 %v2109
    %2777 = vmatprep.subr.bf16.mxu0 0
    %2778 = vmatpush1.bf16.msra.mxu0 %v2110
    %2779 = vmatprep.subr.bf16.mxu0 0
    %2780 = vmatpush1.bf16.msra.mxu0 %v2111
    %2781 = vmatprep.subr.bf16.mxu0 0
    %2782 = vmatpush1.bf16.msra.mxu0 %v2112
    %2783 = vmatprep.subr.bf16.mxu0 0
    %2784 = vmatpush1.bf16.msra.mxu0 %v2113
    %2785 = vmatprep.subr.bf16.mxu0 0
    %2786 = vmatpush1.bf16.msra.mxu0 %v2114
    %2787 = vmatprep.mubr.bf16.mxu0 %v780
    %2788 = vmatmul.mubr.bf16.gmra.mrb[0].mxu0 %v779
    %v2789 = vpop.f32.mrb[0].mxu0
    %v2790 = vadd.f32 %v2750, %v2789
    %v2791 = vpop.f32.mrb[0].mxu0
    %v2792 = vpop.f32.mrb[0].mxu0
    %v2793 = vpop.f32.mrb[0].mxu0
    %2794 = vdwg.mxu0
    %2795 = vmatprep.subr.bf16.mxu0 0
    %2796 = vmatpush1.bf16.msra.mxu0 %v2115
    %2797 = vmatprep.subr.bf16.mxu0 0
    %2798 = vmatpush1.bf16.msra.mxu0 %v2116
    %2799 = vmatprep.subr.bf16.mxu0 0
    %2800 = vmatpush1.bf16.msra.mxu0 %v2117
    %2801 = vmatprep.subr.bf16.mxu0 0
    %2802 = vmatpush1.bf16.msra.mxu0 %v2118
    %2803 = vmatprep.subr.bf16.mxu0 0
    %2804 = vmatpush1.bf16.msra.mxu0 %v2119
    %2805 = vmatprep.subr.bf16.mxu0 0
    %2806 = vmatpush1.bf16.msra.mxu0 %v2120
    %2807 = vmatprep.subr.bf16.mxu0 0
    %2808 = vmatpush1.bf16.msra.mxu0 %v2121
    %2809 = vmatprep.subr.bf16.mxu0 0
    %2810 = vmatpush1.bf16.msra.mxu0 %v2122
    %2811 = vmatprep.subr.bf16.mxu0 0
    %2812 = vmatpush1.bf16.msra.mxu0 %v2123
    %2813 = vmatprep.subr.bf16.mxu0 0
    %2814 = vmatpush1.bf16.msra.mxu0 %v2124
    %2815 = vmatprep.subr.bf16.mxu0 0
    %2816 = vmatpush1.bf16.msra.mxu0 %v2125
    %2817 = vmatprep.subr.bf16.mxu0 0
    %2818 = vmatpush1.bf16.msra.mxu0 %v2126
    %2819 = vmatprep.subr.bf16.mxu0 0
    %2820 = vmatpush1.bf16.msra.mxu0 %v2127
    %2821 = vmatprep.subr.bf16.mxu0 0
    %2822 = vmatpush1.bf16.msra.mxu0 %v2128
    %2823 = vmatprep.subr.bf16.mxu0 0
    %2824 = vmatpush1.bf16.msra.mxu0 %v2129
    %2825 = vmatprep.subr.bf16.mxu0 0
    %2826 = vmatpush1.bf16.msra.mxu0 %v2130
    %2827 = vmatprep.mubr.bf16.mxu0 %v782
    %2828 = vmatmul.mubr.bf16.gmra.mrb[0].mxu0 %v781
    %v2829 = vpop.f32.mrb[0].mxu0
    %v2830 = vadd.f32 %v2790, %v2829
    %v2831 = vpop.f32.mrb[0].mxu0
    %v2832 = vpop.f32.mrb[0].mxu0
    %v2833 = vpop.f32.mrb[0].mxu0
    %2834 = vdwg.mxu0
    %2835 = vmatprep.subr.bf16.mxu0 0
    %2836 = vmatpush1.bf16.msra.mxu0 %v2131
    %2837 = vmatprep.subr.bf16.mxu0 0
    %2838 = vmatpush1.bf16.msra.mxu0 %v2132
    %2839 = vmatprep.subr.bf16.mxu0 0
    %2840 = vmatpush1.bf16.msra.mxu0 %v2133
    %2841 = vmatprep.subr.bf16.mxu0 0
    %2842 = vmatpush1.bf16.msra.mxu0 %v2134
    %2843 = vmatprep.subr.bf16.mxu0 0
    %2844 = vmatpush1.bf16.msra.mxu0 %v2135
    %2845 = vmatprep.subr.bf16.mxu0 0
    %2846 = vmatpush1.bf16.msra.mxu0 %v2136
    %2847 = vmatprep.subr.bf16.mxu0 0
    %2848 = vmatpush1.bf16.msra.mxu0 %v2137
    %2849 = vmatprep.subr.bf16.mxu0 0
    %2850 = vmatpush1.bf16.msra.mxu0 %v2138
    %2851 = vmatprep.subr.bf16.mxu0 0
    %2852 = vmatpush1.bf16.msra.mxu0 %v2139
    %2853 = vmatprep.subr.bf16.mxu0 0
    %2854 = vmatpush1.bf16.msra.mxu0 %v2140
    %2855 = vmatprep.subr.bf16.mxu0 0
    %2856 = vmatpush1.bf16.msra.mxu0 %v2141
    %2857 = vmatprep.subr.bf16.mxu0 0
    %2858 = vmatpush1.bf16.msra.mxu0 %v2142
    %2859 = vmatprep.subr.bf16.mxu0 0
    %2860 = vmatpush1.bf16.msra.mxu0 %v2143
    %2861 = vmatprep.subr.bf16.mxu0 0
    %2862 = vmatpush1.bf16.msra.mxu0 %v2144
    %2863 = vmatprep.subr.bf16.mxu0 0
    %2864 = vmatpush1.bf16.msra.mxu0 %v2145
    %2865 = vmatprep.subr.bf16.mxu0 0
    %2866 = vmatpush1.bf16.msra.mxu0 %v2146
    %2867 = vmatprep.mubr.bf16.mxu0 %v784
    %2868 = vmatmul.mubr.bf16.gmra.mrb[0].mxu0 %v783
    %v2869 = vpop.f32.mrb[0].mxu0
    %v2870 = vadd.f32 %v2830, %v2869
    %v2871 = vpop.f32.mrb[0].mxu0
    %v2872 = vpop.f32.mrb[0].mxu0
    %v2873 = vpop.f32.mrb[0].mxu0
    %2874 = vdwg.mxu0
    %2875 = vmatprep.subr.bf16.mxu0 0
    %2876 = vmatpush1.bf16.msra.mxu0 %v2147
    %2877 = vmatprep.subr.bf16.mxu0 0
    %2878 = vmatpush1.bf16.msra.mxu0 %v2148
    %2879 = vmatprep.subr.bf16.mxu0 0
    %2880 = vmatpush1.bf16.msra.mxu0 %v2149
    %2881 = vmatprep.subr.bf16.mxu0 0
    %2882 = vmatpush1.bf16.msra.mxu0 %v2150
    %2883 = vmatprep.subr.bf16.mxu0 0
    %2884 = vmatpush1.bf16.msra.mxu0 %v2151
    %2885 = vmatprep.subr.bf16.mxu0 0
    %2886 = vmatpush1.bf16.msra.mxu0 %v2152
    %2887 = vmatprep.subr.bf16.mxu0 0
    %2888 = vmatpush1.bf16.msra.mxu0 %v2153
    %2889 = vmatprep.subr.bf16.mxu0 0
    %2890 = vmatpush1.bf16.msra.mxu0 %v2154
    %2891 = vmatprep.subr.bf16.mxu0 0
    %2892 = vmatpush1.bf16.msra.mxu0 %v2155
    %2893 = vmatprep.subr.bf16.mxu0 0
    %2894 = vmatpush1.bf16.msra.mxu0 %v2156
    %2895 = vmatprep.subr.bf16.mxu0 0
    %2896 = vmatpush1.bf16.msra.mxu0 %v2157
    %2897 = vmatprep.subr.bf16.mxu0 0
    %2898 = vmatpush1.bf16.msra.mxu0 %v2158
    %2899 = vmatprep.subr.bf16.mxu0 0
    %2900 = vmatpush1.bf16.msra.mxu0 %v2159
    %2901 = vmatprep.subr.bf16.mxu0 0
    %2902 = vmatpush1.bf16.msra.mxu0 %v2160
    %2903 = vmatprep.subr.bf16.mxu0 0
    %2904 = vmatpush1.bf16.msra.mxu0 %v2161
    %2905 = vmatprep.subr.bf16.mxu0 0
    %2906 = vmatpush1.bf16.msra.mxu0 %v2162
    %2907 = vmatprep.mubr.bf16.mxu0 %v786
    %2908 = vmatmul.mubr.bf16.gmra.mrb[0].mxu0 %v785
    %v2909 = vpop.f32.mrb[0].mxu0
    %v2910 = vadd.f32 %v2870, %v2909
    %v2911 = vpop.f32.mrb[0].mxu0
    %v2912 = vpop.f32.mrb[0].mxu0
    %v2913 = vpop.f32.mrb[0].mxu0
    %2914 = vdwg.mxu0
    %2915 = vmatprep.subr.bf16.mxu0 0
    %2916 = vmatpush1.bf16.msra.mxu0 %v2163
    %2917 = vmatprep.subr.bf16.mxu0 0
    %2918 = vmatpush1.bf16.msra.mxu0 %v2164
    %2919 = vmatprep.subr.bf16.mxu0 0
    %2920 = vmatpush1.bf16.msra.mxu0 %v2165
    %2921 = vmatprep.subr.bf16.mxu0 0
    %2922 = vmatpush1.bf16.msra.mxu0 %v2166
    %2923 = vmatprep.subr.bf16.mxu0 0
    %2924 = vmatpush1.bf16.msra.mxu0 %v2167
    %2925 = vmatprep.subr.bf16.mxu0 0
    %2926 = vmatpush1.bf16.msra.mxu0 %v2168
    %2927 = vmatprep.subr.bf16.mxu0 0
    %2928 = vmatpush1.bf16.msra.mxu0 %v2169
    %2929 = vmatprep.subr.bf16.mxu0 0
    %2930 = vmatpush1.bf16.msra.mxu0 %v2170
    %2931 = vmatprep.subr.bf16.mxu0 0
    %2932 = vmatpush1.bf16.msra.mxu0 %v2171
    %2933 = vmatprep.subr.bf16.mxu0 0
    %2934 = vmatpush1.bf16.msra.mxu0 %v2172
    %2935 = vmatprep.subr.bf16.mxu0 0
    %2936 = vmatpush1.bf16.msra.mxu0 %v2173
    %2937 = vmatprep.subr.bf16.mxu0 0
    %2938 = vmatpush1.bf16.msra.mxu0 %v2174
    %2939 = vmatprep.subr.bf16.mxu0 0
    %2940 = vmatpush1.bf16.msra.mxu0 %v2175
    %2941 = vmatprep.subr.bf16.mxu0 0
    %2942 = vmatpush1.bf16.msra.mxu0 %v2176
    %2943 = vmatprep.subr.bf16.mxu0 0
    %2944 = vmatpush1.bf16.msra.mxu0 %v2177
    %2945 = vmatprep.subr.bf16.mxu0 0
    %2946 = vmatpush1.bf16.msra.mxu0 %v2178
    %2947 = vmatprep.mubr.bf16.mxu0 %v788
    %2948 = vmatmul.mubr.bf16.gmra.mrb[0].mxu0 %v787
    %v2949 = vpop.f32.mrb[0].mxu0
    %v2950 = vadd.f32 %v2910, %v2949
    %v2951 = vpop.f32.mrb[0].mxu0
    %v2952 = vpop.f32.mrb[0].mxu0
    %v2953 = vpop.f32.mrb[0].mxu0
    %2954 = vdwg.mxu0
    %2955 = vmatprep.subr.bf16.mxu0 0
    %2956 = vmatpush1.bf16.msra.mxu0 %v2179
    %2957 = vmatprep.subr.bf16.mxu0 0
    %2958 = vmatpush1.bf16.msra.mxu0 %v2180
    %2959 = vmatprep.subr.bf16.mxu0 0
    %2960 = vmatpush1.bf16.msra.mxu0 %v2181
    %2961 = vmatprep.subr.bf16.mxu0 0
    %2962 = vmatpush1.bf16.msra.mxu0 %v2182
    %2963 = vmatprep.subr.bf16.mxu0 0
    %2964 = vmatpush1.bf16.msra.mxu0 %v2183
    %2965 = vmatprep.subr.bf16.mxu0 0
    %2966 = vmatpush1.bf16.msra.mxu0 %v2184
    %2967 = vmatprep.subr.bf16.mxu0 0
    %2968 = vmatpush1.bf16.msra.mxu0 %v2185
    %2969 = vmatprep.subr.bf16.mxu0 0
    %2970 = vmatpush1.bf16.msra.mxu0 %v2186
    %2971 = vmatprep.subr.bf16.mxu0 0
    %2972 = vmatpush1.bf16.msra.mxu0 %v2187
    %2973 = vmatprep.subr.bf16.mxu0 0
    %2974 = vmatpush1.bf16.msra.mxu0 %v2188
    %2975 = vmatprep.subr.bf16.mxu0 0
    %2976 = vmatpush1.bf16.msra.mxu0 %v2189
    %2977 = vmatprep.subr.bf16.mxu0 0
    %2978 = vmatpush1.bf16.msra.mxu0 %v2190
    %2979 = vmatprep.subr.bf16.mxu0 0
    %2980 = vmatpush1.bf16.msra.mxu0 %v2191
    %2981 = vmatprep.subr.bf16.mxu0 0
    %2982 = vmatpush1.bf16.msra.mxu0 %v2192
    %2983 = vmatprep.subr.bf16.mxu0 0
    %2984 = vmatpush1.bf16.msra.mxu0 %v2193
    %2985 = vmatprep.subr.bf16.mxu0 0
    %2986 = vmatpush1.bf16.msra.mxu0 %v2194
    %2987 = vmatprep.mubr.bf16.mxu0 %v790
    %2988 = vmatmul.mubr.bf16.gmra.mrb[0].mxu0 %v789
    %v2989 = vpop.f32.mrb[0].mxu0
    %v2990 = vadd.f32 %v2950, %v2989
    %v2991 = vpop.f32.mrb[0].mxu0
    %v2992 = vpop.f32.mrb[0].mxu0
    %v2993 = vpop.f32.mrb[0].mxu0
    %2994 = vdwg.mxu0
    %2995 = vmatprep.subr.bf16.mxu0 0
    %2996 = vmatpush1.bf16.msra.mxu0 %v2195
    %2997 = vmatprep.subr.bf16.mxu0 0
    %2998 = vmatpush1.bf16.msra.mxu0 %v2196
    %2999 = vmatprep.subr.bf16.mxu0 0
    %3000 = vmatpush1.bf16.msra.mxu0 %v2197
    %3001 = vmatprep.subr.bf16.mxu0 0
    %3002 = vmatpush1.bf16.msra.mxu0 %v2198
    %3003 = vmatprep.subr.bf16.mxu0 0
    %3004 = vmatpush1.bf16.msra.mxu0 %v2199
    %3005 = vmatprep.subr.bf16.mxu0 0
    %3006 = vmatpush1.bf16.msra.mxu0 %v2200
    %3007 = vmatprep.subr.bf16.mxu0 0
    %3008 = vmatpush1.bf16.msra.mxu0 %v2201
    %3009 = vmatprep.subr.bf16.mxu0 0
    %3010 = vmatpush1.bf16.msra.mxu0 %v2202
    %3011 = vmatprep.subr.bf16.mxu0 0
    %3012 = vmatpush1.bf16.msra.mxu0 %v2203
    %3013 = vmatprep.subr.bf16.mxu0 0
    %3014 = vmatpush1.bf16.msra.mxu0 %v2204
    %3015 = vmatprep.subr.bf16.mxu0 0
    %3016 = vmatpush1.bf16.msra.mxu0 %v2205
    %3017 = vmatprep.subr.bf16.mxu0 0
    %3018 = vmatpush1.bf16.msra.mxu0 %v2206
    %3019 = vmatprep.subr.bf16.mxu0 0
    %3020 = vmatpush1.bf16.msra.mxu0 %v2207
    %3021 = vmatprep.subr.bf16.mxu0 0
    %3022 = vmatpush1.bf16.msra.mxu0 %v2208
    %3023 = vmatprep.subr.bf16.mxu0 0
    %3024 = vmatpush1.bf16.msra.mxu0 %v2209
    %3025 = vmatprep.subr.bf16.mxu0 0
    %3026 = vmatpush1.bf16.msra.mxu0 %v2210
    %3027 = vmatprep.mubr.bf16.mxu0 %v792
    %3028 = vmatmul.mubr.bf16.gmra.mrb[0].mxu0 %v791
    %v3029 = vpop.f32.mrb[0].mxu0
    %v3030 = vadd.f32 %v2990, %v3029
    %v3031 = vpop.f32.mrb[0].mxu0
    %v3032 = vpop.f32.mrb[0].mxu0
    %v3033 = vpop.f32.mrb[0].mxu0
    %3034 = vdwg.mxu0
    %3035 = vmatprep.subr.bf16.mxu0 0
    %3036 = vmatpush1.bf16.msra.mxu0 %v2211
    %3037 = vmatprep.subr.bf16.mxu0 0
    %3038 = vmatpush1.bf16.msra.mxu0 %v2212
    %3039 = vmatprep.subr.bf16.mxu0 0
    %3040 = vmatpush1.bf16.msra.mxu0 %v2213
    %3041 = vmatprep.subr.bf16.mxu0 0
    %3042 = vmatpush1.bf16.msra.mxu0 %v2214
    %3043 = vmatprep.subr.bf16.mxu0 0
    %3044 = vmatpush1.bf16.msra.mxu0 %v2215
    %3045 = vmatprep.subr.bf16.mxu0 0
    %3046 = vmatpush1.bf16.msra.mxu0 %v2216
    %3047 = vmatprep.subr.bf16.mxu0 0
    %3048 = vmatpush1.bf16.msra.mxu0 %v2217
    %3049 = vmatprep.subr.bf16.mxu0 0
    %3050 = vmatpush1.bf16.msra.mxu0 %v2218
    %3051 = vmatprep.subr.bf16.mxu0 0
    %3052 = vmatpush1.bf16.msra.mxu0 %v2219
    %3053 = vmatprep.subr.bf16.mxu0 0
    %3054 = vmatpush1.bf16.msra.mxu0 %v2220
    %3055 = vmatprep.subr.bf16.mxu0 0
    %3056 = vmatpush1.bf16.msra.mxu0 %v2221
    %3057 = vmatprep.subr.bf16.mxu0 0
    %3058 = vmatpush1.bf16.msra.mxu0 %v2222
    %3059 = vmatprep.subr.bf16.mxu0 0
    %3060 = vmatpush1.bf16.msra.mxu0 %v2223
    %3061 = vmatprep.subr.bf16.mxu0 0
    %3062 = vmatpush1.bf16.msra.mxu0 %v2224
    %3063 = vmatprep.subr.bf16.mxu0 0
    %3064 = vmatpush1.bf16.msra.mxu0 %v2225
    %3065 = vmatprep.subr.bf16.mxu0 0
    %3066 = vmatpush1.bf16.msra.mxu0 %v2226
    %3067 = vmatprep.mubr.bf16.mxu0 %v794
    %3068 = vmatmul.mubr.bf16.gmra.mrb[0].mxu0 %v793
    %v3069 = vpop.f32.mrb[0].mxu0
    %v3070 = vadd.f32 %v3030, %v3069
    %v3071 = vpop.f32.mrb[0].mxu0
    %v3072 = vpop.f32.mrb[0].mxu0
    %v3073 = vpop.f32.mrb[0].mxu0
    %3074 = vdwg.mxu0
    %3075 = vmatprep.subr.bf16.mxu0 0
    %3076 = vmatpush1.bf16.msra.mxu0 %v2227
    %3077 = vmatprep.subr.bf16.mxu0 0
    %3078 = vmatpush1.bf16.msra.mxu0 %v2228
    %3079 = vmatprep.subr.bf16.mxu0 0
    %3080 = vmatpush1.bf16.msra.mxu0 %v2229
    %3081 = vmatprep.subr.bf16.mxu0 0
    %3082 = vmatpush1.bf16.msra.mxu0 %v2230
    %3083 = vmatprep.subr.bf16.mxu0 0
    %3084 = vmatpush1.bf16.msra.mxu0 %v2231
    %3085 = vmatprep.subr.bf16.mxu0 0
    %3086 = vmatpush1.bf16.msra.mxu0 %v2232
    %3087 = vmatprep.subr.bf16.mxu0 0
    %3088 = vmatpush1.bf16.msra.mxu0 %v2233
    %3089 = vmatprep.subr.bf16.mxu0 0
    %3090 = vmatpush1.bf16.msra.mxu0 %v2234
    %3091 = vmatprep.subr.bf16.mxu0 0
    %3092 = vmatpush1.bf16.msra.mxu0 %v2235
    %3093 = vmatprep.subr.bf16.mxu0 0
    %3094 = vmatpush1.bf16.msra.mxu0 %v2236
    %3095 = vmatprep.subr.bf16.mxu0 0
    %3096 = vmatpush1.bf16.msra.mxu0 %v2237
    %3097 = vmatprep.subr.bf16.mxu0 0
    %3098 = vmatpush1.bf16.msra.mxu0 %v2238
    %3099 = vmatprep.subr.bf16.mxu0 0
    %3100 = vmatpush1.bf16.msra.mxu0 %v2239
    %3101 = vmatprep.subr.bf16.mxu0 0
    %3102 = vmatpush1.bf16.msra.mxu0 %v2240
    %3103 = vmatprep.subr.bf16.mxu0 0
    %3104 = vmatpush1.bf16.msra.mxu0 %v2241
    %3105 = vmatprep.subr.bf16.mxu0 0
    %3106 = vmatpush1.bf16.msra.mxu0 %v2242
    %3107 = vmatprep.mubr.bf16.mxu0 %v796
    %3108 = vmatmul.mubr.bf16.gmra.mrb[0].mxu0 %v795
    %v3109 = vpop.f32.mrb[0].mxu0
    %v3110 = vadd.f32 %v3070, %v3109
    %v3111 = vpop.f32.mrb[0].mxu0
    %v3112 = vpop.f32.mrb[0].mxu0
    %v3113 = vpop.f32.mrb[0].mxu0
    %3114 = vdwg.mxu0
    %3115 = vmatprep.subr.bf16.mxu0 0
    %3116 = vmatpush1.bf16.msra.mxu0 %v2243
    %3117 = vmatprep.subr.bf16.mxu0 0
    %3118 = vmatpush1.bf16.msra.mxu0 %v2244
    %3119 = vmatprep.subr.bf16.mxu0 0
    %3120 = vmatpush1.bf16.msra.mxu0 %v2245
    %3121 = vmatprep.subr.bf16.mxu0 0
    %3122 = vmatpush1.bf16.msra.mxu0 %v2246
    %3123 = vmatprep.subr.bf16.mxu0 0
    %3124 = vmatpush1.bf16.msra.mxu0 %v2247
    %3125 = vmatprep.subr.bf16.mxu0 0
    %3126 = vmatpush1.bf16.msra.mxu0 %v2248
    %3127 = vmatprep.subr.bf16.mxu0 0
    %3128 = vmatpush1.bf16.msra.mxu0 %v2249
    %3129 = vmatprep.subr.bf16.mxu0 0
    %3130 = vmatpush1.bf16.msra.mxu0 %v2250
    %3131 = vmatprep.subr.bf16.mxu0 0
    %3132 = vmatpush1.bf16.msra.mxu0 %v2251
    %3133 = vmatprep.subr.bf16.mxu0 0
    %3134 = vmatpush1.bf16.msra.mxu0 %v2252
    %3135 = vmatprep.subr.bf16.mxu0 0
    %3136 = vmatpush1.bf16.msra.mxu0 %v2253
    %3137 = vmatprep.subr.bf16.mxu0 0
    %3138 = vmatpush1.bf16.msra.mxu0 %v2254
    %3139 = vmatprep.subr.bf16.mxu0 0
    %3140 = vmatpush1.bf16.msra.mxu0 %v2255
    %3141 = vmatprep.subr.bf16.mxu0 0
    %3142 = vmatpush1.bf16.msra.mxu0 %v2256
    %3143 = vmatprep.subr.bf16.mxu0 0
    %3144 = vmatpush1.bf16.msra.mxu0 %v2257
    %3145 = vmatprep.subr.bf16.mxu0 0
    %3146 = vmatpush1.bf16.msra.mxu0 %v2258
    %3147 = vmatprep.mubr.bf16.mxu0 %v798
    %3148 = vmatmul.mubr.bf16.gmra.mrb[0].mxu0 %v797
    %v3149 = vpop.f32.mrb[0].mxu0
    %v3150 = vadd.f32 %v3110, %v3149
    %v3151 = vpop.f32.mrb[0].mxu0
    %v3152 = vpop.f32.mrb[0].mxu0
    %v3153 = vpop.f32.mrb[0].mxu0
    %3154 = vdwg.mxu0
    %3155 = vmatprep.subr.bf16.mxu0 0
    %3156 = vmatpush1.bf16.msra.mxu0 %v2259
    %3157 = vmatprep.subr.bf16.mxu0 0
    %3158 = vmatpush1.bf16.msra.mxu0 %v2260
    %3159 = vmatprep.subr.bf16.mxu0 0
    %3160 = vmatpush1.bf16.msra.mxu0 %v2261
    %3161 = vmatprep.subr.bf16.mxu0 0
    %3162 = vmatpush1.bf16.msra.mxu0 %v2262
    %3163 = vmatprep.subr.bf16.mxu0 0
    %3164 = vmatpush1.bf16.msra.mxu0 %v2263
    %3165 = vmatprep.subr.bf16.mxu0 0
    %3166 = vmatpush1.bf16.msra.mxu0 %v2264
    %3167 = vmatprep.subr.bf16.mxu0 0
    %3168 = vmatpush1.bf16.msra.mxu0 %v2265
    %3169 = vmatprep.subr.bf16.mxu0 0
    %3170 = vmatpush1.bf16.msra.mxu0 %v2266
    %3171 = vmatprep.subr.bf16.mxu0 0
    %3172 = vmatpush1.bf16.msra.mxu0 %v2267
    %3173 = vmatprep.subr.bf16.mxu0 0
    %3174 = vmatpush1.bf16.msra.mxu0 %v2268
    %3175 = vmatprep.subr.bf16.mxu0 0
    %3176 = vmatpush1.bf16.msra.mxu0 %v2269
    %3177 = vmatprep.subr.bf16.mxu0 0
    %3178 = vmatpush1.bf16.msra.mxu0 %v2270
    %3179 = vmatprep.subr.bf16.mxu0 0
    %3180 = vmatpush1.bf16.msra.mxu0 %v2271
    %3181 = vmatprep.subr.bf16.mxu0 0
    %3182 = vmatpush1.bf16.msra.mxu0 %v2272
    %3183 = vmatprep.subr.bf16.mxu0 0
    %3184 = vmatpush1.bf16.msra.mxu0 %v2273
    %3185 = vmatprep.subr.bf16.mxu0 0
    %3186 = vmatpush1.bf16.msra.mxu0 %v2274
    %3187 = vmatprep.mubr.bf16.mxu0 %v800
    %3188 = vmatmul.mubr.bf16.gmra.mrb[0].mxu0 %v799
    %v3189 = vpop.f32.mrb[0].mxu0
    %v3190 = vadd.f32 %v3150, %v3189
    %v3191 = vpop.f32.mrb[0].mxu0
    %v3192 = vpop.f32.mrb[0].mxu0
    %v3193 = vpop.f32.mrb[0].mxu0
    %3194 = vdwg.mxu0
    %3195 = vmatprep.subr.bf16.mxu0 0
    %3196 = vmatpush1.bf16.msra.mxu0 %v2275
    %3197 = vmatprep.subr.bf16.mxu0 0
    %3198 = vmatpush1.bf16.msra.mxu0 %v2276
    %3199 = vmatprep.subr.bf16.mxu0 0
    %3200 = vmatpush1.bf16.msra.mxu0 %v2277
    %3201 = vmatprep.subr.bf16.mxu0 0
    %3202 = vmatpush1.bf16.msra.mxu0 %v2278
    %3203 = vmatprep.subr.bf16.mxu0 0
    %3204 = vmatpush1.bf16.msra.mxu0 %v2279
    %3205 = vmatprep.subr.bf16.mxu0 0
    %3206 = vmatpush1.bf16.msra.mxu0 %v2280
    %3207 = vmatprep.subr.bf16.mxu0 0
    %3208 = vmatpush1.bf16.msra.mxu0 %v2281
    %3209 = vmatprep.subr.bf16.mxu0 0
    %3210 = vmatpush1.bf16.msra.mxu0 %v2282
    %3211 = vmatprep.subr.bf16.mxu0 0
    %3212 = vmatpush1.bf16.msra.mxu0 %v2283
    %3213 = vmatprep.subr.bf16.mxu0 0
    %3214 = vmatpush1.bf16.msra.mxu0 %v2284
    %3215 = vmatprep.subr.bf16.mxu0 0
    %3216 = vmatpush1.bf16.msra.mxu0 %v2285
    %3217 = vmatprep.subr.bf16.mxu0 0
    %3218 = vmatpush1.bf16.msra.mxu0 %v2286
    %3219 = vmatprep.subr.bf16.mxu0 0
    %3220 = vmatpush1.bf16.msra.mxu0 %v2287
    %3221 = vmatprep.subr.bf16.mxu0 0
    %3222 = vmatpush1.bf16.msra.mxu0 %v2288
    %3223 = vmatprep.subr.bf16.mxu0 0
    %3224 = vmatpush1.bf16.msra.mxu0 %v2289
    %3225 = vmatprep.subr.bf16.mxu0 0
    %3226 = vmatpush1.bf16.msra.mxu0 %v2290
    %3227 = vmatprep.mubr.bf16.mxu0 %v802
    %3228 = vmatmul.mubr.bf16.gmra.mrb[0].mxu0 %v801
    %v3229 = vpop.f32.mrb[0].mxu0
    %v3230 = vadd.f32 %v3190, %v3229
    %v3231 = vpop.f32.mrb[0].mxu0
    %v3232 = vpop.f32.mrb[0].mxu0
    %v3233 = vpop.f32.mrb[0].mxu0
    %3234 = vdwg.mxu0
    %3235 = vmatprep.subr.bf16.mxu0 0
    %3236 = vmatpush1.bf16.msra.mxu0 %v2291
    %3237 = vmatprep.subr.bf16.mxu0 0
    %3238 = vmatpush1.bf16.msra.mxu0 %v2292
    %3239 = vmatprep.subr.bf16.mxu0 0
    %3240 = vmatpush1.bf16.msra.mxu0 %v2293
    %3241 = vmatprep.subr.bf16.mxu0 0
    %3242 = vmatpush1.bf16.msra.mxu0 %v2294
    %3243 = vmatprep.subr.bf16.mxu0 0
    %3244 = vmatpush1.bf16.msra.mxu0 %v2295
    %3245 = vmatprep.subr.bf16.mxu0 0
    %3246 = vmatpush1.bf16.msra.mxu0 %v2296
    %3247 = vmatprep.subr.bf16.mxu0 0
    %3248 = vmatpush1.bf16.msra.mxu0 %v2297
    %3249 = vmatprep.subr.bf16.mxu0 0
    %3250 = vmatpush1.bf16.msra.mxu0 %v2298
    %3251 = vmatprep.subr.bf16.mxu0 0
    %3252 = vmatpush1.bf16.msra.mxu0 %v2299
    %3253 = vmatprep.subr.bf16.mxu0 0
    %3254 = vmatpush1.bf16.msra.mxu0 %v2300
    %3255 = vmatprep.subr.bf16.mxu0 0
    %3256 = vmatpush1.bf16.msra.mxu0 %v2301
    %3257 = vmatprep.subr.bf16.mxu0 0
    %3258 = vmatpush1.bf16.msra.mxu0 %v2302
    %3259 = vmatprep.subr.bf16.mxu0 0
    %3260 = vmatpush1.bf16.msra.mxu0 %v2303
    %3261 = vmatprep.subr.bf16.mxu0 0
    %3262 = vmatpush1.bf16.msra.mxu0 %v2304
    %3263 = vmatprep.subr.bf16.mxu0 0
    %3264 = vmatpush1.bf16.msra.mxu0 %v2305
    %3265 = vmatprep.subr.bf16.mxu0 0
    %3266 = vmatpush1.bf16.msra.mxu0 %v2306
    %3267 = vmatprep.mubr.bf16.mxu0 %v804
    %3268 = vmatmul.mubr.bf16.gmra.mrb[0].mxu0 %v803
    %v3269 = vpop.f32.mrb[0].mxu0
    %v3270 = vadd.f32 %v3230, %v3269
    %v3271 = vpop.f32.mrb[0].mxu0
    %v3272 = vpop.f32.mrb[0].mxu0
    %v3273 = vpop.f32.mrb[0].mxu0
    %3274 = vdwg.mxu0
    %3275 = vmatprep.subr.bf16.mxu0 0
    %3276 = vmatpush1.bf16.msra.mxu0 %v2307
    %3277 = vmatprep.subr.bf16.mxu0 0
    %3278 = vmatpush1.bf16.msra.mxu0 %v2308
    %3279 = vmatprep.subr.bf16.mxu0 0
    %3280 = vmatpush1.bf16.msra.mxu0 %v2309
    %3281 = vmatprep.subr.bf16.mxu0 0
    %3282 = vmatpush1.bf16.msra.mxu0 %v2310
    %3283 = vmatprep.subr.bf16.mxu0 0
    %3284 = vmatpush1.bf16.msra.mxu0 %v2311
    %3285 = vmatprep.subr.bf16.mxu0 0
    %3286 = vmatpush1.bf16.msra.mxu0 %v2312
    %3287 = vmatprep.subr.bf16.mxu0 0
    %3288 = vmatpush1.bf16.msra.mxu0 %v2313
    %3289 = vmatprep.subr.bf16.mxu0 0
    %3290 = vmatpush1.bf16.msra.mxu0 %v2314
    %3291 = vmatprep.subr.bf16.mxu0 0
    %3292 = vmatpush1.bf16.msra.mxu0 %v2315
    %3293 = vmatprep.subr.bf16.mxu0 0
    %3294 = vmatpush1.bf16.msra.mxu0 %v2316
    %3295 = vmatprep.subr.bf16.mxu0 0
    %3296 = vmatpush1.bf16.msra.mxu0 %v2317
    %3297 = vmatprep.subr.bf16.mxu0 0
    %3298 = vmatpush1.bf16.msra.mxu0 %v2318
    %3299 = vmatprep.subr.bf16.mxu0 0
    %3300 = vmatpush1.bf16.msra.mxu0 %v2319
    %3301 = vmatprep.subr.bf16.mxu0 0
    %3302 = vmatpush1.bf16.msra.mxu0 %v2320
    %3303 = vmatprep.subr.bf16.mxu0 0
    %3304 = vmatpush1.bf16.msra.mxu0 %v2321
    %3305 = vmatprep.subr.bf16.mxu0 0
    %3306 = vmatpush1.bf16.msra.mxu0 %v2322
    %3307 = vmatprep.mubr.bf16.mxu0 %v806
    %3308 = vmatmul.mubr.bf16.gmra.mrb[0].mxu0 %v805
    %v3309 = vpop.f32.mrb[0].mxu0
    %v3310 = vadd.f32 %v3270, %v3309
    %v3311 = vpop.f32.mrb[0].mxu0
    %v3312 = vpop.f32.mrb[0].mxu0
    %v3313 = vpop.f32.mrb[0].mxu0
    %3314 = vdwg.mxu0
    %3315 = vmatprep.subr.bf16.mxu0 0
    %3316 = vmatpush1.bf16.msra.mxu0 %v2323
    %3317 = vmatprep.subr.bf16.mxu0 0
    %3318 = vmatpush1.bf16.msra.mxu0 %v2324
    %3319 = vmatprep.subr.bf16.mxu0 0
    %3320 = vmatpush1.bf16.msra.mxu0 %v2325
    %3321 = vmatprep.subr.bf16.mxu0 0
    %3322 = vmatpush1.bf16.msra.mxu0 %v2326
    %3323 = vmatprep.subr.bf16.mxu0 0
    %3324 = vmatpush1.bf16.msra.mxu0 %v2327
    %3325 = vmatprep.subr.bf16.mxu0 0
    %3326 = vmatpush1.bf16.msra.mxu0 %v2328
    %3327 = vmatprep.subr.bf16.mxu0 0
    %3328 = vmatpush1.bf16.msra.mxu0 %v2329
    %3329 = vmatprep.subr.bf16.mxu0 0
    %3330 = vmatpush1.bf16.msra.mxu0 %v2330
    %3331 = vmatprep.subr.bf16.mxu0 0
    %3332 = vmatpush1.bf16.msra.mxu0 %v2331
    %3333 = vmatprep.subr.bf16.mxu0 0
    %3334 = vmatpush1.bf16.msra.mxu0 %v2332
    %3335 = vmatprep.subr.bf16.mxu0 0
    %3336 = vmatpush1.bf16.msra.mxu0 %v2333
    %3337 = vmatprep.subr.bf16.mxu0 0
    %3338 = vmatpush1.bf16.msra.mxu0 %v2334
    %3339 = vmatprep.subr.bf16.mxu0 0
    %3340 = vmatpush1.bf16.msra.mxu0 %v2335
    %3341 = vmatprep.subr.bf16.mxu0 0
    %3342 = vmatpush1.bf16.msra.mxu0 %v2336
    %3343 = vmatprep.subr.bf16.mxu0 0
    %3344 = vmatpush1.bf16.msra.mxu0 %v2337
    %3345 = vmatprep.subr.bf16.mxu0 0
    %3346 = vmatpush1.bf16.msra.mxu0 %v2338
    %3347 = vmatprep.mubr.bf16.mxu0 %v808
    %3348 = vmatmul.mubr.bf16.gmra.mrb[0].mxu0 %v807
    %v3349 = vpop.f32.mrb[0].mxu0
    %v3350 = vadd.f32 %v3310, %v3349
    %v3351 = vpop.f32.mrb[0].mxu0
    %v3352 = vpop.f32.mrb[0].mxu0
    %v3353 = vpop.f32.mrb[0].mxu0
    %3354 = vdwg.mxu0
    %3355 = vmatprep.subr.bf16.mxu0 0
    %3356 = vmatpush1.bf16.msra.mxu0 %v2339
    %3357 = vmatprep.subr.bf16.mxu0 0
    %3358 = vmatpush1.bf16.msra.mxu0 %v2340
    %3359 = vmatprep.subr.bf16.mxu0 0
    %3360 = vmatpush1.bf16.msra.mxu0 %v2341
    %3361 = vmatprep.subr.bf16.mxu0 0
    %3362 = vmatpush1.bf16.msra.mxu0 %v2342
    %3363 = vmatprep.subr.bf16.mxu0 0
    %3364 = vmatpush1.bf16.msra.mxu0 %v2343
    %3365 = vmatprep.subr.bf16.mxu0 0
    %3366 = vmatpush1.bf16.msra.mxu0 %v2344
    %3367 = vmatprep.subr.bf16.mxu0 0
    %3368 = vmatpush1.bf16.msra.mxu0 %v2345
    %3369 = vmatprep.subr.bf16.mxu0 0
    %3370 = vmatpush1.bf16.msra.mxu0 %v2346
    %3371 = vmatprep.subr.bf16.mxu0 0
    %3372 = vmatpush1.bf16.msra.mxu0 %v2347
    %3373 = vmatprep.subr.bf16.mxu0 0
    %3374 = vmatpush1.bf16.msra.mxu0 %v2348
    %3375 = vmatprep.subr.bf16.mxu0 0
    %3376 = vmatpush1.bf16.msra.mxu0 %v2349
    %3377 = vmatprep.subr.bf16.mxu0 0
    %3378 = vmatpush1.bf16.msra.mxu0 %v2350
    %3379 = vmatprep.subr.bf16.mxu0 0
    %3380 = vmatpush1.bf16.msra.mxu0 %v2351
    %3381 = vmatprep.subr.bf16.mxu0 0
    %3382 = vmatpush1.bf16.msra.mxu0 %v2352
    %3383 = vmatprep.subr.bf16.mxu0 0
    %3384 = vmatpush1.bf16.msra.mxu0 %v2353
    %3385 = vmatprep.subr.bf16.mxu0 0
    %3386 = vmatpush1.bf16.msra.mxu0 %v2354
    %3387 = vmatprep.mubr.bf16.mxu0 %v810
    %3388 = vmatmul.mubr.bf16.gmra.mrb[0].mxu0 %v809
    %v3389 = vpop.f32.mrb[0].mxu0
    %v3390 = vadd.f32 %v3350, %v3389
    %v3391 = vpop.f32.mrb[0].mxu0
    %v3392 = vpop.f32.mrb[0].mxu0
    %v3393 = vpop.f32.mrb[0].mxu0
    %3394 = vdwg.mxu0
    %3395 = vmatprep.subr.bf16.mxu0 0
    %3396 = vmatpush1.bf16.msra.mxu0 %v2355
    %3397 = vmatprep.subr.bf16.mxu0 0
    %3398 = vmatpush1.bf16.msra.mxu0 %v2356
    %3399 = vmatprep.subr.bf16.mxu0 0
    %3400 = vmatpush1.bf16.msra.mxu0 %v2357
    %3401 = vmatprep.subr.bf16.mxu0 0
    %3402 = vmatpush1.bf16.msra.mxu0 %v2358
    %3403 = vmatprep.subr.bf16.mxu0 0
    %3404 = vmatpush1.bf16.msra.mxu0 %v2359
    %3405 = vmatprep.subr.bf16.mxu0 0
    %3406 = vmatpush1.bf16.msra.mxu0 %v2360
    %3407 = vmatprep.subr.bf16.mxu0 0
    %3408 = vmatpush1.bf16.msra.mxu0 %v2361
    %3409 = vmatprep.subr.bf16.mxu0 0
    %3410 = vmatpush1.bf16.msra.mxu0 %v2362
    %3411 = vmatprep.subr.bf16.mxu0 0
    %3412 = vmatpush1.bf16.msra.mxu0 %v2363
    %3413 = vmatprep.subr.bf16.mxu0 0
    %3414 = vmatpush1.bf16.msra.mxu0 %v2364
    %3415 = vmatprep.subr.bf16.mxu0 0
    %3416 = vmatpush1.bf16.msra.mxu0 %v2365
    %3417 = vmatprep.subr.bf16.mxu0 0
    %3418 = vmatpush1.bf16.msra.mxu0 %v2366
    %3419 = vmatprep.subr.bf16.mxu0 0
    %3420 = vmatpush1.bf16.msra.mxu0 %v2367
    %3421 = vmatprep.subr.bf16.mxu0 0
    %3422 = vmatpush1.bf16.msra.mxu0 %v2368
    %3423 = vmatprep.subr.bf16.mxu0 0
    %3424 = vmatpush1.bf16.msra.mxu0 %v2369
    %3425 = vmatprep.subr.bf16.mxu0 0
    %3426 = vmatpush1.bf16.msra.mxu0 %v2370
    %3427 = vmatprep.mubr.bf16.mxu0 %v812
    %3428 = vmatmul.mubr.bf16.gmra.mrb[0].mxu0 %v811
    %v3429 = vpop.f32.mrb[0].mxu0
    %v3430 = vadd.f32 %v3390, %v3429
    %v3431 = vpop.f32.mrb[0].mxu0
    %v3432 = vpop.f32.mrb[0].mxu0
    %v3433 = vpop.f32.mrb[0].mxu0
    %3434 = vdwg.mxu0
    %v3435 = vmax.f32 %v3430, 0.0
    %v3436 = vpack.c.bf16 %v3435, %v3435
    %v3437 = vld [vmem:[#allocation7] sm:$0xf]
    %v3438 = vld [vmem:[#allocation7 + $0x4] sm:$0xf]
    %v3439 = vld [vmem:[#allocation7 + $0x8] sm:$0xf]
    %v3440 = vld [vmem:[#allocation7 + $0xc] sm:$0xf]
    %v3441 = vld [vmem:[#allocation7 + $0x10] sm:$0xf]
    %v3442 = vld [vmem:[#allocation7 + $0x14] sm:$0xf]
    %v3443 = vld [vmem:[#allocation7 + $0x18] sm:$0xf]
    %v3444 = vld [vmem:[#allocation7 + $0x1c] sm:$0xf]
    %v3445 = vld [vmem:[#allocation7 + $0x20] sm:$0xf]
    %v3446 = vld [vmem:[#allocation7 + $0x24] sm:$0xf]
    %v3447 = vld [vmem:[#allocation7 + $0x28] sm:$0xf]
    %v3448 = vld [vmem:[#allocation7 + $0x2c] sm:$0xf]
    %v3449 = vld [vmem:[#allocation7 + $0x30] sm:$0xf]
    %v3450 = vld [vmem:[#allocation7 + $0x34] sm:$0xf]
    %v3451 = vld [vmem:[#allocation7 + $0x38] sm:$0xf]
    %v3452 = vld [vmem:[#allocation7 + $0x3c] sm:$0xf]
    %v3453 = vld [vmem:[#allocation10 + $0x1] sm:$0x1]
    %v3454 = vlaneseq
    %v3455 = vshrl.u32 %v3454, 7
    %v3456 = vsub.s32 0, %v3455
    %v3457 = vrot.slane %v3453, %v3456
    %v3474 = vunpack.c.l.b16 %v3437
    %v3475 = vunpack.c.l.b16 %v3438
    %v3476 = vunpack.c.l.b16 %v3439
    %v3477 = vunpack.c.l.b16 %v3440
    %v3478 = vunpack.c.l.b16 %v3441
    %v3479 = vunpack.c.l.b16 %v3442
    %v3480 = vunpack.c.l.b16 %v3443
    %v3481 = vunpack.c.l.b16 %v3444
    %v3482 = vunpack.c.l.b16 %v3445
    %v3483 = vunpack.c.l.b16 %v3446
    %v3484 = vunpack.c.l.b16 %v3447
    %v3485 = vunpack.c.l.b16 %v3448
    %v3486 = vunpack.c.l.b16 %v3449
    %v3487 = vunpack.c.l.b16 %v3450
    %v3488 = vunpack.c.l.b16 %v3451
    %v3489 = vunpack.c.l.b16 %v3452
    %v3490 = vpack.c.b16 %v3475, %v3474
    %v3491 = vpack.c.b16 %v3477, %v3476
    %v3492 = vpack.c.b16 %v3479, %v3478
    %v3493 = vpack.c.b16 %v3481, %v3480
    %v3494 = vpack.c.b16 %v3483, %v3482
    %v3495 = vpack.c.b16 %v3485, %v3484
    %v3496 = vpack.c.b16 %v3487, %v3486
    %v3497 = vpack.c.b16 %v3489, %v3488
    %3506 = vmatprep.subr.bf16.mxu0 0
    %3507 = vmatpush1.bf16.msra.mxu0 %v3490
    %3508 = vmatprep.subr.bf16.mxu0 0
    %3509 = vmatpush1.bf16.msra.mxu0 %v3491
    %3510 = vmatprep.subr.bf16.mxu0 0
    %3511 = vmatpush1.bf16.msra.mxu0 %v3492
    %3512 = vmatprep.subr.bf16.mxu0 0
    %3513 = vmatpush1.bf16.msra.mxu0 %v3493
    %3514 = vmatprep.subr.bf16.mxu0 0
    %3515 = vmatpush1.bf16.msra.mxu0 %v3494
    %3516 = vmatprep.subr.bf16.mxu0 0
    %3517 = vmatpush1.bf16.msra.mxu0 %v3495
    %3518 = vmatprep.subr.bf16.mxu0 0
    %3519 = vmatpush1.bf16.msra.mxu0 %v3496
    %3520 = vmatprep.subr.bf16.mxu0 0
    %3521 = vmatpush1.bf16.msra.mxu0 %v3497
    %3522 = vmatprep.subr.bf16.mxu0 0
    %3523 = vmatpush1.bf16.msra.mxu0 0
    %3524 = vmatprep.subr.bf16.mxu0 0
    %3525 = vmatpush1.bf16.msra.mxu0 0
    %3526 = vmatprep.subr.bf16.mxu0 0
    %3527 = vmatpush1.bf16.msra.mxu0 0
    %3528 = vmatprep.subr.bf16.mxu0 0
    %3529 = vmatpush1.bf16.msra.mxu0 0
    %3530 = vmatprep.subr.bf16.mxu0 0
    %3531 = vmatpush1.bf16.msra.mxu0 0
    %3532 = vmatprep.subr.bf16.mxu0 0
    %3533 = vmatpush1.bf16.msra.mxu0 0
    %3534 = vmatprep.subr.bf16.mxu0 0
    %3535 = vmatpush1.bf16.msra.mxu0 0
    %3536 = vmatprep.subr.bf16.mxu0 0
    %3537 = vmatpush1.bf16.msra.mxu0 0
    %3538 = vmatprep.mubr.bf16.mxu0 0
    %3539 = vmatmul.mubr.bf16.gmra.mrb[0].mxu0 %v3436
    %v3540 = vpop.f32.mrb[0].mxu0
    %v3541 = vadd.f32 %v3457, %v3540
    %v3542 = vpop.f32.mrb[0].mxu0
    %v3543 = vpop.f32.mrb[0].mxu0
    %v3544 = vpop.f32.mrb[0].mxu0
    %3545 = vdwg.mxu0
    %v3546 = vmax.f32 %v3541, 0.0
    %v3547 = vpack.c.bf16 %v3546, %v3546
    %v3548 = vld [vmem:[#allocation8] sm:$0xf]
    %v3549 = vld [vmem:[#allocation8 + $0x4] sm:$0xf]
    %v3550 = vld [vmem:[#allocation8 + $0x8] sm:$0xf]
    %v3551 = vld [vmem:[#allocation8 + $0xc] sm:$0xf]
    %v3552 = vld [vmem:[#allocation8 + $0x10] sm:$0xf]
    %v3553 = vld [vmem:[#allocation8 + $0x14] sm:$0xf]
    %v3554 = vld [vmem:[#allocation8 + $0x18] sm:$0xf]
    %v3555 = vld [vmem:[#allocation8 + $0x1c] sm:$0xf]
    %v3556 = vld [vmem:[#allocation8 + $0x20] sm:$0xf]
    %v3557 = vld [vmem:[#allocation8 + $0x24] sm:$0xf]
    %v3558 = vld [vmem:[#allocation8 + $0x28] sm:$0xf]
    %v3559 = vld [vmem:[#allocation8 + $0x2c] sm:$0xf]
    %v3560 = vld [vmem:[#allocation8 + $0x30] sm:$0xf]
    %v3561 = vld [vmem:[#allocation8 + $0x34] sm:$0xf]
    %v3562 = vld [vmem:[#allocation8 + $0x38] sm:$0xf]
    %v3563 = vld [vmem:[#allocation8 + $0x3c] sm:$0xf]
    %v3564 = vld [vmem:[#allocation10 + $0x2] sm:$0x1]
    %v3565 = vlaneseq
    %v3566 = vshrl.u32 %v3565, 7
    %v3567 = vsub.s32 0, %v3566
    %v3568 = vrot.slane %v3564, %v3567
    %v3585 = vunpack.c.l.b16 %v3548
    %v3586 = vunpack.c.l.b16 %v3549
    %v3587 = vunpack.c.l.b16 %v3550
    %v3588 = vunpack.c.l.b16 %v3551
    %v3589 = vunpack.c.l.b16 %v3552
    %v3590 = vunpack.c.l.b16 %v3553
    %v3591 = vunpack.c.l.b16 %v3554
    %v3592 = vunpack.c.l.b16 %v3555
    %v3593 = vunpack.c.l.b16 %v3556
    %v3594 = vunpack.c.l.b16 %v3557
    %v3595 = vunpack.c.l.b16 %v3558
    %v3596 = vunpack.c.l.b16 %v3559
    %v3597 = vunpack.c.l.b16 %v3560
    %v3598 = vunpack.c.l.b16 %v3561
    %v3599 = vunpack.c.l.b16 %v3562
    %v3600 = vunpack.c.l.b16 %v3563
    %v3601 = vpack.c.b16 %v3586, %v3585
    %v3602 = vpack.c.b16 %v3588, %v3587
    %v3603 = vpack.c.b16 %v3590, %v3589
    %v3604 = vpack.c.b16 %v3592, %v3591
    %v3605 = vpack.c.b16 %v3594, %v3593
    %v3606 = vpack.c.b16 %v3596, %v3595
    %v3607 = vpack.c.b16 %v3598, %v3597
    %v3608 = vpack.c.b16 %v3600, %v3599
    %3617 = vmatprep.subr.bf16.mxu0 0
    %3618 = vmatpush1.bf16.msra.mxu0 %v3601
    %3619 = vmatprep.subr.bf16.mxu0 0
    %3620 = vmatpush1.bf16.msra.mxu0 %v3602
    %3621 = vmatprep.subr.bf16.mxu0 0
    %3622 = vmatpush1.bf16.msra.mxu0 %v3603
    %3623 = vmatprep.subr.bf16.mxu0 0
    %3624 = vmatpush1.bf16.msra.mxu0 %v3604
    %3625 = vmatprep.subr.bf16.mxu0 0
    %3626 = vmatpush1.bf16.msra.mxu0 %v3605
    %3627 = vmatprep.subr.bf16.mxu0 0
    %3628 = vmatpush1.bf16.msra.mxu0 %v3606
    %3629 = vmatprep.subr.bf16.mxu0 0
    %3630 = vmatpush1.bf16.msra.mxu0 %v3607
    %3631 = vmatprep.subr.bf16.mxu0 0
    %3632 = vmatpush1.bf16.msra.mxu0 %v3608
    %3633 = vmatprep.subr.bf16.mxu0 0
    %3634 = vmatpush1.bf16.msra.mxu0 0
    %3635 = vmatprep.subr.bf16.mxu0 0
    %3636 = vmatpush1.bf16.msra.mxu0 0
    %3637 = vmatprep.subr.bf16.mxu0 0
    %3638 = vmatpush1.bf16.msra.mxu0 0
    %3639 = vmatprep.subr.bf16.mxu0 0
    %3640 = vmatpush1.bf16.msra.mxu0 0
    %3641 = vmatprep.subr.bf16.mxu0 0
    %3642 = vmatpush1.bf16.msra.mxu0 0
    %3643 = vmatprep.subr.bf16.mxu0 0
    %3644 = vmatpush1.bf16.msra.mxu0 0
    %3645 = vmatprep.subr.bf16.mxu0 0
    %3646 = vmatpush1.bf16.msra.mxu0 0
    %3647 = vmatprep.subr.bf16.mxu0 0
    %3648 = vmatpush1.bf16.msra.mxu0 0
    %3649 = vmatprep.mubr.bf16.mxu0 0
    %3650 = vmatmul.mubr.bf16.gmra.mrb[0].mxu0 %v3547
    %v3651 = vpop.f32.mrb[0].mxu0
    %v3652 = vadd.f32 %v3568, %v3651
    %v3653 = vpop.f32.mrb[0].mxu0
    %v3654 = vpop.f32.mrb[0].mxu0
    %v3655 = vpop.f32.mrb[0].mxu0
    %3656 = vdwg.mxu0
    %v3657 = vlaneseq
    %v3658 = vand.u32 %v3657, 127
    %vm3659 = vcmp.lt.s32.totalorder %v3658, 10
    %v3660 = vsel %vm3659, %v3652, -inf
    %3661 = vmax.xlane.f32.xlu0 %v3660
    %v3662 = vpop.xlane.xlu0 %3661
    %v3663 = vsub.f32 %v3660, %v3662
    %v3664 = vmul.f32 %v3663, 1.442695
    %v3665 = vpow.pop %v3664
    %3666 = vadd.xlane.f32.xlu0 %v3665
    %v3667 = vpop.xlane.xlu0 %3666
    %v3668 = vlog2.pop %v3667
    %v3669 = vmul.f32 %v3668, 0.6931472
    %v3670 = vsub.f32 %v3663, %v3669
    %3671 = vst [vmem:[#allocation11] sm:$0xff] %v3670
    // Predicated region
    $region42: #{tpu_custom_call.1} parent=1 // pred_check
      _
    $region43: #{tpu_custom_call.1} parent=1 // pred_check_branch
      %3673 = sbr.rel (0) target = $region45
    $region44: #{tpu_custom_call.1} parent=1 // pred_region
      %s3675 = ssub.s32 128, 128
      %3676 = vsyncadd [#allocation4], %s3675
      %s3678 = sshll.u32 [#allocation11], 4
      %s3679 = int_to_ptr.vmem [resolvable:$true] %s3678
      %3681 = dma.vmem_to_hbm [thread:$0]  %s3679, 128, %s5, [#allocation4]
    $region45: #{tpu_custom_call.1} parent=1 // pred_fallthru
      _
    // Predicated region
    $region46: #{tpu_custom_call.1} parent=1 // pred_check
      _
    $region47: #{tpu_custom_call.1} parent=1 // pred_check_branch
      %3683 = sbr.rel (0) target = $region49
    $region48: #{tpu_custom_call.1} parent=1 // pred_region
      %3684 = dma.done [#allocation4], 128
    $region49: #{tpu_custom_call.1} parent=1 // pred_fallthru
      _
    %3685 = vsyncpa [#allocation3], 1
    %3686 = vsyncpa [#allocation6], 1
    %3687 = vsyncpa [#allocation9], 1
    %3688 = vsyncpa [#allocation4], 1

</llo_original>
